<compile_context>
chip_gen: v7x
topology: tpu7x:2x2x1
jax: 0.10.0
libtpu: 0.0.40
codegen_flags: <defaults>
</compile_context>

<pallas_src>
import functools

import jax
import jax.numpy as jnp
from jax.experimental import pallas as pl
from jax.experimental.pallas import tpu as pltpu

BN_EPS = 1e-5
LANE = 128  # lane-dense output width


# ---------------------------------------------------------------------------
# Fused forward kernel (one grid step == one graph)
# ---------------------------------------------------------------------------
def gin_fused_kernel(eps, num_gin, adj_ref, x_ref, in_w_ref, in_b_ref, *rest):
    """Whole GIN forward for one graph.

    rest = [w1, g1, b1, w2, g2, b2] * num_gin       (GIN layer params)
         + [pred_w_stack, pred_b_sum]               (merged prediction head)
         + [o_ref]                                  (lane-dense output tile)
    """
    gin_refs = rest[: 6 * num_gin]
    pred_w_ref, pred_b_ref = rest[6 * num_gin], rest[6 * num_gin + 1]
    o_ref = rest[-1]

    adj = adj_ref[0]                       # (N, N)  bf16, values 0/1
    x = x_ref[0]                           # (N, Din) bf16
    n_nodes = adj_ref.shape[1]
    inv_n = 1.0 / float(n_nodes)

    def bn_relu(h, gamma_ref, beta_ref):
        # Batch-stat BN (biased variance) + ReLU, folded into h*scale + shift.
        mean = jnp.sum(h, axis=0, keepdims=True) * inv_n
        mean_sq = jnp.sum(h * h, axis=0, keepdims=True) * inv_n
        var = jnp.maximum(mean_sq - mean * mean, 0.0)     # clamp: no NaN rsqrt
        scale = gamma_ref[...] * jax.lax.rsqrt(var + BN_EPS)
        shift = beta_ref[...] - mean * scale
        return jnp.maximum(h * scale + shift, 0.0)

    def gin_layer(h, w1_ref, g1_ref, b1_ref, w2_ref, g2_ref, b2_ref):
        # GINConv: (1 + eps) * h_v + sum_{u in N(v)} h_u
        agg = jnp.dot(adj, h.astype(jnp.bfloat16),
                      preferred_element_type=jnp.float32)
        z = agg + h if eps == 0.0 else agg + (1.0 + eps) * h
        # GIN_MLP: Linear(no bias) -> BatchNorm1d -> ReLU -> Linear(no bias)
        h1 = jnp.dot(z.astype(jnp.bfloat16), w1_ref[...],
                     preferred_element_type=jnp.float32)
        h1 = bn_relu(h1, g1_ref, b1_ref)
        h2 = jnp.dot(h1.astype(jnp.bfloat16), w2_ref[...],
                     preferred_element_type=jnp.float32)
        # GIN.forward: outer batch_norms[i] then ReLU
        return bn_relu(h2, g2_ref, b2_ref)

    # Input layer (op='linear'): h = x @ W^T + b   (f32 accumulation)
    h = (jnp.dot(x, in_w_ref[...], preferred_element_type=jnp.float32)
         + in_b_ref[...])

    # SumPooling per hidden representation; prediction heads merged into one
    # matmul at the end (numerically identical to summing per-head matmuls).
    pooled = [jnp.sum(h, axis=0, keepdims=True)]           # (1, F) each
    for i in range(num_gin):
        w1, g1, b1, w2, g2, b2 = gin_refs[6 * i: 6 * i + 6]
        h = gin_layer(h, w1, g1, b1, w2, g2, b2)
        pooled.append(jnp.sum(h, axis=0, keepdims=True))

    pooled_cat = jnp.concatenate(pooled, axis=-1)           # (1, (L+1)*F)
    score = (jnp.dot(pooled_cat.astype(jnp.bfloat16), pred_w_ref[...],
                     preferred_element_type=jnp.float32)
             + pred_b_ref[...])                              # (1, C_pad)

    # Lane-dense full-tile (8, C_pad) writeback; real score lives in row 0.
    o_ref[...] = jnp.broadcast_to(score, o_ref.shape)


# ---------------------------------------------------------------------------
# Wrapper: one pallas_call, grid over the graph batch
# ---------------------------------------------------------------------------
def gin_forward(params, adj, x, num_classes, eps=0.0):
    num_gin = len(params["gin"])
    B, N, _ = adj.shape
    dim_in = x.shape[-1]

    # bf16 matmul operands (adj is 0/1 -> exact); BN params / biases stay f32.
    adj_bf = adj.astype(jnp.bfloat16)
    x_bf = x.astype(jnp.bfloat16)
    in_w = params["input_w"].astype(jnp.bfloat16)
    in_b = params["input_b"]

    args = [adj_bf, x_bf, in_w, in_b]
    in_specs = [
        pl.BlockSpec((1, N, N), lambda b: (b, 0, 0)),        # adj (per-graph)
        pl.BlockSpec((1, N, dim_in), lambda b: (b, 0, 0)),   # x   (per-graph)
        pl.BlockSpec(in_w.shape, lambda b: (0, 0)),          # weights resident
        pl.BlockSpec(in_b.shape, lambda b: (0, 0)),
    ]

    for p in params["gin"]:
        layer_args = [p["w1"].astype(jnp.bfloat16), p["bn1_g"], p["bn1_b"],
                      p["w2"].astype(jnp.bfloat16), p["bn2_g"], p["bn2_b"]]
        args += layer_args
        in_specs += [pl.BlockSpec(a.shape, lambda b: (0, 0)) for a in layer_args]

    pred_w = params["pred_w_stack"].astype(jnp.bfloat16)     # ((L+1)*F, C_pad)
    pred_b = params["pred_b_sum"]                            # (1, C_pad) f32
    args += [pred_w, pred_b]
    in_specs += [pl.BlockSpec(pred_w.shape, lambda b: (0, 0)),
                 pl.BlockSpec(pred_b.shape, lambda b: (0, 0))]

    c_pad = pred_w.shape[1]
    out = pl.pallas_call(
        functools.partial(gin_fused_kernel, eps, num_gin),
        grid=(B,),
        out_shape=jax.ShapeDtypeStruct((B, 8, c_pad), jnp.float32),
        in_specs=in_specs,
        out_specs=pl.BlockSpec((1, 8, c_pad), lambda b: (b, 0, 0)),
        compiler_params=pltpu.CompilerParams(
            dimension_semantics=("parallel",),
            # Size to adj tile + weights + live (N, dim_h) intermediates with
            # double-buffering for larger graphs; ample at these shapes.
            vmem_limit_bytes=32 * 1024 * 1024,
        ),
    )(*args)
    # drop(.) == identity (eval); real score in row 0, first num_classes lanes.
    return out[:, 0, :num_classes]


# ---------------------------------------------------------------------------
# Parameter init (deterministic, PyTorch-like uniform(-1/sqrt(fan_in), ...))
# ---------------------------------------------------------------------------
def _unif(key, shape, fan_in):
    bound = 1.0 / jnp.sqrt(jnp.float32(fan_in))
    return jax.random.uniform(key, shape, jnp.float32, -bound, bound)


def init_params(key, dim_in, dim_h, num_classes, num_layers):
    keys = iter(jax.random.split(key, 64))
    params = {}
    # InputLayer (op='linear'): Linear(dim_in, dim_h), stored transposed.
    params["input_w"] = _unif(next(keys), (dim_in, dim_h), dim_in)
    params["input_b"] = _unif(next(keys), (1, dim_h), dim_in)

    out_size = dim_h  # InputLayer.get_output_size() for op='linear'

    params["gin"] = []
    for i in range(num_layers - 1):
        in_dim = out_size if i == 0 else dim_h
        params["gin"].append({
            "w1": _unif(next(keys), (in_dim, dim_h), in_dim),   # Linear(no bias)
            "bn1_g": jnp.ones((1, dim_h), jnp.float32),         # MLP BatchNorm1d
            "bn1_b": jnp.zeros((1, dim_h), jnp.float32),
            "w2": _unif(next(keys), (dim_h, dim_h), dim_h),     # Linear(no bias)
            "bn2_g": jnp.ones((1, dim_h), jnp.float32),         # outer BatchNorm1d
            "bn2_b": jnp.zeros((1, dim_h), jnp.float32),
        })

    # Prediction heads: only the first num_layers heads are used (as in torch:
    # hidden_reprs has num_layers entries).  Merge them into one K-stacked,
    # lane-padded weight and a single summed bias.
    c_pad = max(LANE, pl.cdiv(num_classes, LANE) * LANE)
    w_blocks, b_sum = [], jnp.zeros((1, num_classes), jnp.float32)
    for i in range(num_layers):
        in_dim = out_size if i == 0 else dim_h
        w = _unif(next(keys), (in_dim, num_classes), in_dim)
        b = _unif(next(keys), (1, num_classes), in_dim)
        w_blocks.append(jnp.pad(w, ((0, 0), (0, c_pad - num_classes))))
        b_sum = b_sum + b
    params["pred_w_stack"] = jnp.concatenate(w_blocks, axis=0)   # ((L)*F, C_pad)
    params["pred_b_sum"] = jnp.pad(b_sum, ((0, 0), (0, c_pad - num_classes)))
    # (The extra (num_layers+1)-th torch head is never used in forward.)
    return params


if __name__ == "__main__":
    BATCH = 8          # batch of graphs -> grid axis ("parallel")
    N_NODES = 16
    DIM_IN = 32
    DIM_H = 32
    NUM_CLASSES = 8
    NUM_LAYERS = 3

    key = jax.random.PRNGKey(0)
    k_x, k_p = jax.random.split(key)

    # Node features (B, N, dim_in)
    x = jax.random.normal(k_x, (BATCH, N_NODES, DIM_IN), jnp.float32)

    # Deterministic per-graph ring graphs with different strides (dense adjacency).
    idx = jnp.arange(N_NODES)
    adjs = []
    for b in range(BATCH):
        step = (b % (N_NODES - 1)) + 1
        a = jnp.zeros((N_NODES, N_NODES), jnp.float32)
        a = a.at[idx, (idx + step) % N_NODES].set(1.0)
        a = a.at[idx, (idx - step) % N_NODES].set(1.0)
        adjs.append(a)
    adj = jnp.stack(adjs, axis=0)

    params = init_params(k_p, DIM_IN, DIM_H, NUM_CLASSES, NUM_LAYERS)

    out = gin_forward(params, adj, x, NUM_CLASSES, eps=0.0)
    jax.block_until_ready(out)
    assert out.shape == (BATCH, NUM_CLASSES)
    print("KERNEL_OK")
</pallas_src>

<mosaic_0001>
module attributes {stable_mosaic.version = 11 : i64} {
  func.func @gin_fused_kernel(%arg0: i32, %arg1: memref<1x16x16xbf16, #tpu.memory_space<vmem>>, %arg2: memref<1x16x32xbf16, #tpu.memory_space<vmem>>, %arg3: memref<32x32xbf16, #tpu.memory_space<vmem>>, %arg4: memref<1x32xf32, #tpu.memory_space<vmem>>, %arg5: memref<32x32xbf16, #tpu.memory_space<vmem>>, %arg6: memref<1x32xf32, #tpu.memory_space<vmem>>, %arg7: memref<1x32xf32, #tpu.memory_space<vmem>>, %arg8: memref<32x32xbf16, #tpu.memory_space<vmem>>, %arg9: memref<1x32xf32, #tpu.memory_space<vmem>>, %arg10: memref<1x32xf32, #tpu.memory_space<vmem>>, %arg11: memref<32x32xbf16, #tpu.memory_space<vmem>>, %arg12: memref<1x32xf32, #tpu.memory_space<vmem>>, %arg13: memref<1x32xf32, #tpu.memory_space<vmem>>, %arg14: memref<32x32xbf16, #tpu.memory_space<vmem>>, %arg15: memref<1x32xf32, #tpu.memory_space<vmem>>, %arg16: memref<1x32xf32, #tpu.memory_space<vmem>>, %arg17: memref<96x128xbf16, #tpu.memory_space<vmem>>, %arg18: memref<1x128xf32, #tpu.memory_space<vmem>>, %arg19: memref<1x8x128xf32, #tpu.memory_space<vmem>>) attributes {dimension_semantics = [#tpu.dimension_semantics<parallel>], iteration_bounds = array<i64: 8>, scalar_prefetch = 0 : i64, scratch_operands = 0 : i64, tpu.core_type = #tpu.core_type<tc>, window_params = [{transform_indices = @transform_0, window_bounds = array<i64: 1, 16, 16>}, {transform_indices = @transform_1, window_bounds = array<i64: 1, 16, 32>}, {pipeline_mode = #tpu.pipeline_mode<synchronous>, transform_indices = @transform_2, window_bounds = array<i64: 32, 32>}, {pipeline_mode = #tpu.pipeline_mode<synchronous>, transform_indices = @transform_3, window_bounds = array<i64: 1, 32>}, {pipeline_mode = #tpu.pipeline_mode<synchronous>, transform_indices = @transform_4, window_bounds = array<i64: 32, 32>}, {pipeline_mode = #tpu.pipeline_mode<synchronous>, transform_indices = @transform_5, window_bounds = array<i64: 1, 32>}, {pipeline_mode = #tpu.pipeline_mode<synchronous>, transform_indices = @transform_6, window_bounds = array<i64: 1, 32>}, {pipeline_mode = #tpu.pipeline_mode<synchronous>, transform_indices = @transform_7, window_bounds = array<i64: 32, 32>}, {pipeline_mode = #tpu.pipeline_mode<synchronous>, transform_indices = @transform_8, window_bounds = array<i64: 1, 32>}, {pipeline_mode = #tpu.pipeline_mode<synchronous>, transform_indices = @transform_9, window_bounds = array<i64: 1, 32>}, {pipeline_mode = #tpu.pipeline_mode<synchronous>, transform_indices = @transform_10, window_bounds = array<i64: 32, 32>}, {pipeline_mode = #tpu.pipeline_mode<synchronous>, transform_indices = @transform_11, window_bounds = array<i64: 1, 32>}, {pipeline_mode = #tpu.pipeline_mode<synchronous>, transform_indices = @transform_12, window_bounds = array<i64: 1, 32>}, {pipeline_mode = #tpu.pipeline_mode<synchronous>, transform_indices = @transform_13, window_bounds = array<i64: 32, 32>}, {pipeline_mode = #tpu.pipeline_mode<synchronous>, transform_indices = @transform_14, window_bounds = array<i64: 1, 32>}, {pipeline_mode = #tpu.pipeline_mode<synchronous>, transform_indices = @transform_15, window_bounds = array<i64: 1, 32>}, {pipeline_mode = #tpu.pipeline_mode<synchronous>, transform_indices = @transform_16, window_bounds = array<i64: 96, 128>}, {pipeline_mode = #tpu.pipeline_mode<synchronous>, transform_indices = @transform_17, window_bounds = array<i64: 1, 128>}, {transform_indices = @transform_18, window_bounds = array<i64: 1, 8, 128>}]} {
    %c0 = arith.constant 0 : index
    %c0_0 = arith.constant 0 : index
    %c0_1 = arith.constant 0 : index
    %0 = vector.load %arg1[%c0, %c0_0, %c0_1] : memref<1x16x16xbf16, #tpu.memory_space<vmem>>, vector<1x16x16xbf16>
    %1 = vector.shape_cast %0 : vector<1x16x16xbf16> to vector<16x16xbf16>
    %c0_2 = arith.constant 0 : index
    %c0_3 = arith.constant 0 : index
    %c0_4 = arith.constant 0 : index
    %2 = vector.load %arg2[%c0_2, %c0_3, %c0_4] : memref<1x16x32xbf16, #tpu.memory_space<vmem>>, vector<1x16x32xbf16>
    %3 = vector.shape_cast %2 : vector<1x16x32xbf16> to vector<16x32xbf16>
    %c0_5 = arith.constant 0 : index
    %c0_6 = arith.constant 0 : index
    %4 = vector.load %arg3[%c0_5, %c0_6] : memref<32x32xbf16, #tpu.memory_space<vmem>>, vector<32x32xbf16>
    %cst = arith.constant dense<0.000000e+00> : vector<16x32xf32>
    %5 = tpu.matmul %3, %4, %cst {dimension_numbers = #tpu.dot_dimension_numbers<[1], [0], [0], [1], [0, 0, 1, 1], [], []>} : vector<16x32xbf16>, vector<32x32xbf16>, vector<16x32xf32> -> vector<16x32xf32>
    %c0_7 = arith.constant 0 : index
    %c0_8 = arith.constant 0 : index
    %6 = vector.load %arg4[%c0_7, %c0_8] : memref<1x32xf32, #tpu.memory_space<vmem>>, vector<1x32xf32>
    %7 = vector.broadcast %6 : vector<1x32xf32> to vector<16x32xf32>
    %8 = arith.addf %5, %7 : vector<16x32xf32>
    %cst_9 = arith.constant dense<0.000000e+00> : vector<32xf32>
    %9 = vector.multi_reduction <add>, %8, %cst_9 [0] : vector<16x32xf32> to vector<32xf32>
    %10 = vector.shape_cast %9 : vector<32xf32> to vector<1x32xf32>
    %11 = arith.truncf %8 : vector<16x32xf32> to vector<16x32xbf16>
    %cst_10 = arith.constant dense<0.000000e+00> : vector<16x32xf32>
    %12 = tpu.matmul %1, %11, %cst_10 {dimension_numbers = #tpu.dot_dimension_numbers<[1], [0], [0], [1], [0, 0, 1, 1], [], []>} : vector<16x16xbf16>, vector<16x32xbf16>, vector<16x32xf32> -> vector<16x32xf32>
    %13 = arith.addf %12, %8 : vector<16x32xf32>
    %14 = arith.truncf %13 : vector<16x32xf32> to vector<16x32xbf16>
    %c0_11 = arith.constant 0 : index
    %c0_12 = arith.constant 0 : index
    %15 = vector.load %arg5[%c0_11, %c0_12] : memref<32x32xbf16, #tpu.memory_space<vmem>>, vector<32x32xbf16>
    %cst_13 = arith.constant dense<0.000000e+00> : vector<16x32xf32>
    %16 = tpu.matmul %14, %15, %cst_13 {dimension_numbers = #tpu.dot_dimension_numbers<[1], [0], [0], [1], [0, 0, 1, 1], [], []>} : vector<16x32xbf16>, vector<32x32xbf16>, vector<16x32xf32> -> vector<16x32xf32>
    %cst_14 = arith.constant dense<0.000000e+00> : vector<32xf32>
    %17 = vector.multi_reduction <add>, %16, %cst_14 [0] : vector<16x32xf32> to vector<32xf32>
    %18 = vector.shape_cast %17 : vector<32xf32> to vector<1x32xf32>
    %cst_15 = arith.constant 6.250000e-02 : f32
    %19 = vector.broadcast %cst_15 : f32 to vector<1x32xf32>
    %20 = arith.mulf %18, %19 : vector<1x32xf32>
    %21 = arith.mulf %16, %16 : vector<16x32xf32>
    %cst_16 = arith.constant dense<0.000000e+00> : vector<32xf32>
    %22 = vector.multi_reduction <add>, %21, %cst_16 [0] : vector<16x32xf32> to vector<32xf32>
    %23 = vector.shape_cast %22 : vector<32xf32> to vector<1x32xf32>
    %cst_17 = arith.constant 6.250000e-02 : f32
    %24 = vector.broadcast %cst_17 : f32 to vector<1x32xf32>
    %25 = arith.mulf %23, %24 : vector<1x32xf32>
    %26 = arith.mulf %20, %20 : vector<1x32xf32>
    %27 = arith.subf %25, %26 : vector<1x32xf32>
    %cst_18 = arith.constant 0.000000e+00 : f32
    %28 = vector.broadcast %cst_18 : f32 to vector<1x32xf32>
    %29 = arith.maximumf %27, %28 : vector<1x32xf32>
    %c0_19 = arith.constant 0 : index
    %c0_20 = arith.constant 0 : index
    %30 = vector.load %arg6[%c0_19, %c0_20] : memref<1x32xf32, #tpu.memory_space<vmem>>, vector<1x32xf32>
    %cst_21 = arith.constant 9.99999974E-6 : f32
    %31 = vector.broadcast %cst_21 : f32 to vector<1x32xf32>
    %32 = arith.addf %29, %31 : vector<1x32xf32>
    %33 = math.rsqrt %32 : vector<1x32xf32>
    %34 = arith.mulf %30, %33 : vector<1x32xf32>
    %c0_22 = arith.constant 0 : index
    %c0_23 = arith.constant 0 : index
    %35 = vector.load %arg7[%c0_22, %c0_23] : memref<1x32xf32, #tpu.memory_space<vmem>>, vector<1x32xf32>
    %36 = arith.mulf %20, %34 : vector<1x32xf32>
    %37 = arith.subf %35, %36 : vector<1x32xf32>
    %38 = vector.broadcast %34 : vector<1x32xf32> to vector<16x32xf32>
    %39 = arith.mulf %16, %38 : vector<16x32xf32>
    %40 = vector.broadcast %37 : vector<1x32xf32> to vector<16x32xf32>
    %41 = arith.addf %39, %40 : vector<16x32xf32>
    %cst_24 = arith.constant 0.000000e+00 : f32
    %42 = vector.broadcast %cst_24 : f32 to vector<16x32xf32>
    %43 = arith.maximumf %41, %42 : vector<16x32xf32>
    %44 = arith.truncf %43 : vector<16x32xf32> to vector<16x32xbf16>
    %c0_25 = arith.constant 0 : index
    %c0_26 = arith.constant 0 : index
    %45 = vector.load %arg8[%c0_25, %c0_26] : memref<32x32xbf16, #tpu.memory_space<vmem>>, vector<32x32xbf16>
    %cst_27 = arith.constant dense<0.000000e+00> : vector<16x32xf32>
    %46 = tpu.matmul %44, %45, %cst_27 {dimension_numbers = #tpu.dot_dimension_numbers<[1], [0], [0], [1], [0, 0, 1, 1], [], []>} : vector<16x32xbf16>, vector<32x32xbf16>, vector<16x32xf32> -> vector<16x32xf32>
    %cst_28 = arith.constant dense<0.000000e+00> : vector<32xf32>
    %47 = vector.multi_reduction <add>, %46, %cst_28 [0] : vector<16x32xf32> to vector<32xf32>
    %48 = vector.shape_cast %47 : vector<32xf32> to vector<1x32xf32>
    %cst_29 = arith.constant 6.250000e-02 : f32
    %49 = vector.broadcast %cst_29 : f32 to vector<1x32xf32>
    %50 = arith.mulf %48, %49 : vector<1x32xf32>
    %51 = arith.mulf %46, %46 : vector<16x32xf32>
    %cst_30 = arith.constant dense<0.000000e+00> : vector<32xf32>
    %52 = vector.multi_reduction <add>, %51, %cst_30 [0] : vector<16x32xf32> to vector<32xf32>
    %53 = vector.shape_cast %52 : vector<32xf32> to vector<1x32xf32>
    %cst_31 = arith.constant 6.250000e-02 : f32
    %54 = vector.broadcast %cst_31 : f32 to vector<1x32xf32>
    %55 = arith.mulf %53, %54 : vector<1x32xf32>
    %56 = arith.mulf %50, %50 : vector<1x32xf32>
    %57 = arith.subf %55, %56 : vector<1x32xf32>
    %cst_32 = arith.constant 0.000000e+00 : f32
    %58 = vector.broadcast %cst_32 : f32 to vector<1x32xf32>
    %59 = arith.maximumf %57, %58 : vector<1x32xf32>
    %c0_33 = arith.constant 0 : index
    %c0_34 = arith.constant 0 : index
    %60 = vector.load %arg9[%c0_33, %c0_34] : memref<1x32xf32, #tpu.memory_space<vmem>>, vector<1x32xf32>
    %cst_35 = arith.constant 9.99999974E-6 : f32
    %61 = vector.broadcast %cst_35 : f32 to vector<1x32xf32>
    %62 = arith.addf %59, %61 : vector<1x32xf32>
    %63 = math.rsqrt %62 : vector<1x32xf32>
    %64 = arith.mulf %60, %63 : vector<1x32xf32>
    %c0_36 = arith.constant 0 : index
    %c0_37 = arith.constant 0 : index
    %65 = vector.load %arg10[%c0_36, %c0_37] : memref<1x32xf32, #tpu.memory_space<vmem>>, vector<1x32xf32>
    %66 = arith.mulf %50, %64 : vector<1x32xf32>
    %67 = arith.subf %65, %66 : vector<1x32xf32>
    %68 = vector.broadcast %64 : vector<1x32xf32> to vector<16x32xf32>
    %69 = arith.mulf %46, %68 : vector<16x32xf32>
    %70 = vector.broadcast %67 : vector<1x32xf32> to vector<16x32xf32>
    %71 = arith.addf %69, %70 : vector<16x32xf32>
    %cst_38 = arith.constant 0.000000e+00 : f32
    %72 = vector.broadcast %cst_38 : f32 to vector<16x32xf32>
    %73 = arith.maximumf %71, %72 : vector<16x32xf32>
    %cst_39 = arith.constant dense<0.000000e+00> : vector<32xf32>
    %74 = vector.multi_reduction <add>, %73, %cst_39 [0] : vector<16x32xf32> to vector<32xf32>
    %75 = vector.shape_cast %74 : vector<32xf32> to vector<1x32xf32>
    %76 = arith.truncf %73 : vector<16x32xf32> to vector<16x32xbf16>
    %cst_40 = arith.constant dense<0.000000e+00> : vector<16x32xf32>
    %77 = tpu.matmul %1, %76, %cst_40 {dimension_numbers = #tpu.dot_dimension_numbers<[1], [0], [0], [1], [0, 0, 1, 1], [], []>} : vector<16x16xbf16>, vector<16x32xbf16>, vector<16x32xf32> -> vector<16x32xf32>
    %78 = arith.addf %77, %73 : vector<16x32xf32>
    %79 = arith.truncf %78 : vector<16x32xf32> to vector<16x32xbf16>
    %c0_41 = arith.constant 0 : index
    %c0_42 = arith.constant 0 : index
    %80 = vector.load %arg11[%c0_41, %c0_42] : memref<32x32xbf16, #tpu.memory_space<vmem>>, vector<32x32xbf16>
    %cst_43 = arith.constant dense<0.000000e+00> : vector<16x32xf32>
    %81 = tpu.matmul %79, %80, %cst_43 {dimension_numbers = #tpu.dot_dimension_numbers<[1], [0], [0], [1], [0, 0, 1, 1], [], []>} : vector<16x32xbf16>, vector<32x32xbf16>, vector<16x32xf32> -> vector<16x32xf32>
    %cst_44 = arith.constant dense<0.000000e+00> : vector<32xf32>
    %82 = vector.multi_reduction <add>, %81, %cst_44 [0] : vector<16x32xf32> to vector<32xf32>
    %83 = vector.shape_cast %82 : vector<32xf32> to vector<1x32xf32>
    %cst_45 = arith.constant 6.250000e-02 : f32
    %84 = vector.broadcast %cst_45 : f32 to vector<1x32xf32>
    %85 = arith.mulf %83, %84 : vector<1x32xf32>
    %86 = arith.mulf %81, %81 : vector<16x32xf32>
    %cst_46 = arith.constant dense<0.000000e+00> : vector<32xf32>
    %87 = vector.multi_reduction <add>, %86, %cst_46 [0] : vector<16x32xf32> to vector<32xf32>
    %88 = vector.shape_cast %87 : vector<32xf32> to vector<1x32xf32>
    %cst_47 = arith.constant 6.250000e-02 : f32
    %89 = vector.broadcast %cst_47 : f32 to vector<1x32xf32>
    %90 = arith.mulf %88, %89 : vector<1x32xf32>
    %91 = arith.mulf %85, %85 : vector<1x32xf32>
    %92 = arith.subf %90, %91 : vector<1x32xf32>
    %cst_48 = arith.constant 0.000000e+00 : f32
    %93 = vector.broadcast %cst_48 : f32 to vector<1x32xf32>
    %94 = arith.maximumf %92, %93 : vector<1x32xf32>
    %c0_49 = arith.constant 0 : index
    %c0_50 = arith.constant 0 : index
    %95 = vector.load %arg12[%c0_49, %c0_50] : memref<1x32xf32, #tpu.memory_space<vmem>>, vector<1x32xf32>
    %cst_51 = arith.constant 9.99999974E-6 : f32
    %96 = vector.broadcast %cst_51 : f32 to vector<1x32xf32>
    %97 = arith.addf %94, %96 : vector<1x32xf32>
    %98 = math.rsqrt %97 : vector<1x32xf32>
    %99 = arith.mulf %95, %98 : vector<1x32xf32>
    %c0_52 = arith.constant 0 : index
    %c0_53 = arith.constant 0 : index
    %100 = vector.load %arg13[%c0_52, %c0_53] : memref<1x32xf32, #tpu.memory_space<vmem>>, vector<1x32xf32>
    %101 = arith.mulf %85, %99 : vector<1x32xf32>
    %102 = arith.subf %100, %101 : vector<1x32xf32>
    %103 = vector.broadcast %99 : vector<1x32xf32> to vector<16x32xf32>
    %104 = arith.mulf %81, %103 : vector<16x32xf32>
    %105 = vector.broadcast %102 : vector<1x32xf32> to vector<16x32xf32>
    %106 = arith.addf %104, %105 : vector<16x32xf32>
    %cst_54 = arith.constant 0.000000e+00 : f32
    %107 = vector.broadcast %cst_54 : f32 to vector<16x32xf32>
    %108 = arith.maximumf %106, %107 : vector<16x32xf32>
    %109 = arith.truncf %108 : vector<16x32xf32> to vector<16x32xbf16>
    %c0_55 = arith.constant 0 : index
    %c0_56 = arith.constant 0 : index
    %110 = vector.load %arg14[%c0_55, %c0_56] : memref<32x32xbf16, #tpu.memory_space<vmem>>, vector<32x32xbf16>
    %cst_57 = arith.constant dense<0.000000e+00> : vector<16x32xf32>
    %111 = tpu.matmul %109, %110, %cst_57 {dimension_numbers = #tpu.dot_dimension_numbers<[1], [0], [0], [1], [0, 0, 1, 1], [], []>} : vector<16x32xbf16>, vector<32x32xbf16>, vector<16x32xf32> -> vector<16x32xf32>
    %cst_58 = arith.constant dense<0.000000e+00> : vector<32xf32>
    %112 = vector.multi_reduction <add>, %111, %cst_58 [0] : vector<16x32xf32> to vector<32xf32>
    %113 = vector.shape_cast %112 : vector<32xf32> to vector<1x32xf32>
    %cst_59 = arith.constant 6.250000e-02 : f32
    %114 = vector.broadcast %cst_59 : f32 to vector<1x32xf32>
    %115 = arith.mulf %113, %114 : vector<1x32xf32>
    %116 = arith.mulf %111, %111 : vector<16x32xf32>
    %cst_60 = arith.constant dense<0.000000e+00> : vector<32xf32>
    %117 = vector.multi_reduction <add>, %116, %cst_60 [0] : vector<16x32xf32> to vector<32xf32>
    %118 = vector.shape_cast %117 : vector<32xf32> to vector<1x32xf32>
    %cst_61 = arith.constant 6.250000e-02 : f32
    %119 = vector.broadcast %cst_61 : f32 to vector<1x32xf32>
    %120 = arith.mulf %118, %119 : vector<1x32xf32>
    %121 = arith.mulf %115, %115 : vector<1x32xf32>
    %122 = arith.subf %120, %121 : vector<1x32xf32>
    %cst_62 = arith.constant 0.000000e+00 : f32
    %123 = vector.broadcast %cst_62 : f32 to vector<1x32xf32>
    %124 = arith.maximumf %122, %123 : vector<1x32xf32>
    %c0_63 = arith.constant 0 : index
    %c0_64 = arith.constant 0 : index
    %125 = vector.load %arg15[%c0_63, %c0_64] : memref<1x32xf32, #tpu.memory_space<vmem>>, vector<1x32xf32>
    %cst_65 = arith.constant 9.99999974E-6 : f32
    %126 = vector.broadcast %cst_65 : f32 to vector<1x32xf32>
    %127 = arith.addf %124, %126 : vector<1x32xf32>
    %128 = math.rsqrt %127 : vector<1x32xf32>
    %129 = arith.mulf %125, %128 : vector<1x32xf32>
    %c0_66 = arith.constant 0 : index
    %c0_67 = arith.constant 0 : index
    %130 = vector.load %arg16[%c0_66, %c0_67] : memref<1x32xf32, #tpu.memory_space<vmem>>, vector<1x32xf32>
    %131 = arith.mulf %115, %129 : vector<1x32xf32>
    %132 = arith.subf %130, %131 : vector<1x32xf32>
    %133 = vector.broadcast %129 : vector<1x32xf32> to vector<16x32xf32>
    %134 = arith.mulf %111, %133 : vector<16x32xf32>
    %135 = vector.broadcast %132 : vector<1x32xf32> to vector<16x32xf32>
    %136 = arith.addf %134, %135 : vector<16x32xf32>
    %cst_68 = arith.constant 0.000000e+00 : f32
    %137 = vector.broadcast %cst_68 : f32 to vector<16x32xf32>
    %138 = arith.maximumf %136, %137 : vector<16x32xf32>
    %cst_69 = arith.constant dense<0.000000e+00> : vector<32xf32>
    %139 = vector.multi_reduction <add>, %138, %cst_69 [0] : vector<16x32xf32> to vector<32xf32>
    %140 = vector.shape_cast %139 : vector<32xf32> to vector<1x32xf32>
    %141 = tpu.concatenate %10, %75, %140 in 1 : vector<1x32xf32>, vector<1x32xf32>, vector<1x32xf32> -> vector<1x96xf32>
    %142 = arith.truncf %141 : vector<1x96xf32> to vector<1x96xbf16>
    %c0_70 = arith.constant 0 : index
    %c0_71 = arith.constant 0 : index
    %143 = vector.load %arg17[%c0_70, %c0_71] : memref<96x128xbf16, #tpu.memory_space<vmem>>, vector<96x128xbf16>
    %cst_72 = arith.constant dense<0.000000e+00> : vector<1x128xf32>
    %144 = tpu.matmul %142, %143, %cst_72 {dimension_numbers = #tpu.dot_dimension_numbers<[1], [0], [0], [1], [0, 0, 1, 1], [], []>} : vector<1x96xbf16>, vector<96x128xbf16>, vector<1x128xf32> -> vector<1x128xf32>
    %c0_73 = arith.constant 0 : index
    %c0_74 = arith.constant 0 : index
    %145 = vector.load %arg18[%c0_73, %c0_74] : memref<1x128xf32, #tpu.memory_space<vmem>>, vector<1x128xf32>
    %146 = arith.addf %144, %145 : vector<1x128xf32>
    %147 = vector.shape_cast %146 : vector<1x128xf32> to vector<1x1x128xf32>
    %148 = vector.broadcast %147 : vector<1x1x128xf32> to vector<1x8x128xf32>
    %c0_75 = arith.constant 0 : index
    %c0_76 = arith.constant 0 : index
    %c0_77 = arith.constant 0 : index
    %149 = vector.load %arg19[%c0_75, %c0_76, %c0_77] : memref<1x8x128xf32, #tpu.memory_space<vmem>>, vector<1x8x128xf32>
    tpu.vector_store %arg19[%c0_75, %c0_76, %c0_77], %148 {strides = array<i32>} : memref<1x8x128xf32, #tpu.memory_space<vmem>>, vector<1x8x128xf32>,
    return
  }
  func.func @transform_0(%arg0: i32) -> (i32, i32, i32) {
    %c0_i32 = arith.constant 0 : i32
    %c0_i32_0 = arith.constant 0 : i32
    %c0_i32_1 = arith.constant 0 : i32
    return %arg0, %c0_i32, %c0_i32_0 : i32, i32, i32
  }
  func.func @transform_1(%arg0: i32) -> (i32, i32, i32) {
    %c0_i32 = arith.constant 0 : i32
    %c0_i32_0 = arith.constant 0 : i32
    %c0_i32_1 = arith.constant 0 : i32
    return %arg0, %c0_i32, %c0_i32_0 : i32, i32, i32
  }
  func.func @transform_2(%arg0: i32) -> (i32, i32) {
    %c0_i32 = arith.constant 0 : i32
    %c0_i32_0 = arith.constant 0 : i32
    %c0_i32_1 = arith.constant 0 : i32
    return %c0_i32, %c0_i32_0 : i32, i32
  }
  func.func @transform_3(%arg0: i32) -> (i32, i32) {
    %c0_i32 = arith.constant 0 : i32
    %c0_i32_0 = arith.constant 0 : i32
    %c0_i32_1 = arith.constant 0 : i32
    return %c0_i32, %c0_i32_0 : i32, i32
  }
  func.func @transform_4(%arg0: i32) -> (i32, i32) {
    %c0_i32 = arith.constant 0 : i32
    %c0_i32_0 = arith.constant 0 : i32
    %c0_i32_1 = arith.constant 0 : i32
    return %c0_i32, %c0_i32_0 : i32, i32
  }
  func.func @transform_5(%arg0: i32) -> (i32, i32) {
    %c0_i32 = arith.constant 0 : i32
    %c0_i32_0 = arith.constant 0 : i32
    %c0_i32_1 = arith.constant 0 : i32
    return %c0_i32, %c0_i32_0 : i32, i32
  }
  func.func @transform_6(%arg0: i32) -> (i32, i32) {
    %c0_i32 = arith.constant 0 : i32
    %c0_i32_0 = arith.constant 0 : i32
    %c0_i32_1 = arith.constant 0 : i32
    return %c0_i32, %c0_i32_0 : i32, i32
  }
  func.func @transform_7(%arg0: i32) -> (i32, i32) {
    %c0_i32 = arith.constant 0 : i32
    %c0_i32_0 = arith.constant 0 : i32
    %c0_i32_1 = arith.constant 0 : i32
    return %c0_i32, %c0_i32_0 : i32, i32
  }
  func.func @transform_8(%arg0: i32) -> (i32, i32) {
    %c0_i32 = arith.constant 0 : i32
    %c0_i32_0 = arith.constant 0 : i32
    %c0_i32_1 = arith.constant 0 : i32
    return %c0_i32, %c0_i32_0 : i32, i32
  }
  func.func @transform_9(%arg0: i32) -> (i32, i32) {
    %c0_i32 = arith.constant 0 : i32
    %c0_i32_0 = arith.constant 0 : i32
    %c0_i32_1 = arith.constant 0 : i32
    return %c0_i32, %c0_i32_0 : i32, i32
  }
  func.func @transform_10(%arg0: i32) -> (i32, i32) {
    %c0_i32 = arith.constant 0 : i32
    %c0_i32_0 = arith.constant 0 : i32
    %c0_i32_1 = arith.constant 0 : i32
    return %c0_i32, %c0_i32_0 : i32, i32
  }
  func.func @transform_11(%arg0: i32) -> (i32, i32) {
    %c0_i32 = arith.constant 0 : i32
    %c0_i32_0 = arith.constant 0 : i32
    %c0_i32_1 = arith.constant 0 : i32
    return %c0_i32, %c0_i32_0 : i32, i32
  }
  func.func @transform_12(%arg0: i32) -> (i32, i32) {
    %c0_i32 = arith.constant 0 : i32
    %c0_i32_0 = arith.constant 0 : i32
    %c0_i32_1 = arith.constant 0 : i32
    return %c0_i32, %c0_i32_0 : i32, i32
  }
  func.func @transform_13(%arg0: i32) -> (i32, i32) {
    %c0_i32 = arith.constant 0 : i32
    %c0_i32_0 = arith.constant 0 : i32
    %c0_i32_1 = arith.constant 0 : i32
    return %c0_i32, %c0_i32_0 : i32, i32
  }
  func.func @transform_14(%arg0: i32) -> (i32, i32) {
    %c0_i32 = arith.constant 0 : i32
    %c0_i32_0 = arith.constant 0 : i32
    %c0_i32_1 = arith.constant 0 : i32
    return %c0_i32, %c0_i32_0 : i32, i32
  }
  func.func @transform_15(%arg0: i32) -> (i32, i32) {
    %c0_i32 = arith.constant 0 : i32
    %c0_i32_0 = arith.constant 0 : i32
    %c0_i32_1 = arith.constant 0 : i32
    return %c0_i32, %c0_i32_0 : i32, i32
  }
  func.func @transform_16(%arg0: i32) -> (i32, i32) {
    %c0_i32 = arith.constant 0 : i32
    %c0_i32_0 = arith.constant 0 : i32
    %c0_i32_1 = arith.constant 0 : i32
    return %c0_i32, %c0_i32_0 : i32, i32
  }
  func.func @transform_17(%arg0: i32) -> (i32, i32) {
    %c0_i32 = arith.constant 0 : i32
    %c0_i32_0 = arith.constant 0 : i32
    %c0_i32_1 = arith.constant 0 : i32
    return %c0_i32, %c0_i32_0 : i32, i32
  }
  func.func @transform_18(%arg0: i32) -> (i32, i32, i32) {
    %c0_i32 = arith.constant 0 : i32
    %c0_i32_0 = arith.constant 0 : i32
    %c0_i32_1 = arith.constant 0 : i32
    return %arg0, %c0_i32, %c0_i32_0 : i32, i32, i32
  }
}

</mosaic_0001>

<llo_original>
// kernel: tpu_custom_call.1
$region0: #{tpu_custom_call.1}
  #allocation0 [shape = 'u32[]', space=smem, size = 0x4, offset = 0x4, fixed_abs, tag = 'smem constant byte address 0x4 - core index']
  #allocation1 [shape = 'u32[144,128]{1,0:T(1,128)}', space=vmem, size = 0x12000, scoped, tag = 'internal scratch']
  %s0 = inlined_call_operand.hbm [shape: bf16[8,16,16], index: 0, kind: input, shape index: {}]
  %s1 = inlined_call_operand.hbm [shape: bf16[8,16,32], index: 1, kind: input, shape index: {}]
  %s2 = inlined_call_operand.hbm [shape: bf16[32,32], index: 2, kind: input, shape index: {}]
  %s3 = inlined_call_operand.vmem [shape: f32[1,32], index: 3, kind: input, shape index: {}]
  %s4 = inlined_call_operand.hbm [shape: bf16[32,32], index: 4, kind: input, shape index: {}]
  %s5 = inlined_call_operand.vmem [shape: f32[1,32], index: 5, kind: input, shape index: {}]
  %s6 = inlined_call_operand.vmem [shape: f32[1,32], index: 6, kind: input, shape index: {}]
  %s7 = inlined_call_operand.hbm [shape: bf16[32,32], index: 7, kind: input, shape index: {}]
  %s8 = inlined_call_operand.vmem [shape: f32[1,32], index: 8, kind: input, shape index: {}]
  %s9 = inlined_call_operand.vmem [shape: f32[1,32], index: 9, kind: input, shape index: {}]
  %s10 = inlined_call_operand.hbm [shape: bf16[32,32], index: 10, kind: input, shape index: {}]
  %s11 = inlined_call_operand.vmem [shape: f32[1,32], index: 11, kind: input, shape index: {}]
  %s12 = inlined_call_operand.vmem [shape: f32[1,32], index: 12, kind: input, shape index: {}]
  %s13 = inlined_call_operand.hbm [shape: bf16[32,32], index: 13, kind: input, shape index: {}]
  %s14 = inlined_call_operand.vmem [shape: f32[1,32], index: 14, kind: input, shape index: {}]
  %s15 = inlined_call_operand.vmem [shape: f32[1,32], index: 15, kind: input, shape index: {}]
  %s16 = inlined_call_operand.vmem [shape: bf16[96,128], index: 16, kind: input, shape index: {}]
  %s17 = inlined_call_operand.vmem [shape: f32[1,128], index: 17, kind: input, shape index: {}]
  %s18 = inlined_call_operand.hbm [shape: f32[8,8,128], index: 18, kind: output, shape index: {}]
  %s19 = sld [smem:[#allocation0]]
  $region133: #{tpu_custom_call.1} parent=0
    _
  %s21 = ssub.s32 1, %s19
  %s22 = scalar_select 0, %s21, %s19
  $region1: #{tpu_custom_call.1} parent=0
    #allocation2 [shape = 'u8[8192]{0}', space=vmem, size = 0x2000, scoped, tag = 'input window, operand 0']
    #allocation3 [shape = 's32[2]{0}', space=sflag, size = 0x8, scoped, tag = 'scoped memory for tpu_custom_call.1']
    #allocation4 [shape = 's32[2]{0}', space=sflag, size = 0x8, scoped, tag = 'scoped memory for tpu_custom_call.1']
    #allocation5 [shape = 'u8[8192]{0}', space=vmem, size = 0x2000, scoped, tag = 'input window, operand 1']
    #allocation6 [shape = 's32[2]{0}', space=sflag, size = 0x8, scoped, tag = 'scoped memory for tpu_custom_call.1']
    #allocation7 [shape = 'u8[8192]{0}', space=vmem, size = 0x2000, scoped, tag = 'input window, operand 2, single buffered']
    #allocation8 [shape = 'u8[8192]{0}', space=vmem, size = 0x2000, scoped, tag = 'input window, operand 4, single buffered']
    #allocation9 [shape = 's32[1]{0}', space=sflag, size = 0x4, scoped, tag = 'scoped memory for tpu_custom_call.1']
    #allocation10 [shape = 'u8[8192]{0}', space=vmem, size = 0x2000, scoped, tag = 'input window, operand 7, single buffered']
    #allocation11 [shape = 'u8[8192]{0}', space=vmem, size = 0x2000, scoped, tag = 'input window, operand 10, single buffered']
    #allocation12 [shape = 's32[1]{0}', space=sflag, size = 0x4, scoped, tag = 'scoped memory for tpu_custom_call.1']
    #allocation13 [shape = 'u8[8192]{0}', space=vmem, size = 0x2000, scoped, tag = 'input window, operand 13, single buffered']
    #allocation14 [shape = 'u8[8192]{0}', space=vmem, size = 0x2000, scoped, tag = 'output window, operand 0']
    %23 = vsyncpa [#allocation3], 0
    %s24 = scalar_lea.sflag [#allocation3], 1
    %25 = vsyncpa %s24, 0
    %26 = vsyncpa [#allocation6], 0
    %s27 = scalar_lea.sflag [#allocation6], 1
    %28 = vsyncpa %s27, 0
    %29 = vsyncpa [#allocation9], 0
    %30 = vsyncpa [#allocation12], 0
    %31 = vsyncpa [#allocation4], 0
    %s32 = scalar_lea.sflag [#allocation4], 1
    %33 = vsyncpa %s32, 0
    loop: start=0, step=1, limit=10
    $region2: #{tpu_custom_call.1} parent=1 // loop_pre_header
      _
    $region3: #{tpu_custom_call.1} parent=1 // loop_header
      %s35 = sphi 0, %s39
      %p36 = scmp.ge.s32.totalorder %s35, 10
      %s45 = sphi 0, %s47
      %s48 = sphi 0, %s45
      %s49 = sphi 0, %s48
      %s65 = sphi 0, %s49
      %s71 = sphi 0, %s73
      %s74 = sphi 0, %s71
      %s75 = sphi 0, %s74
      %s91 = sphi 0, %s75
      %s95 = sphi 0, %s95
      %s97 = sphi 0, %s95
      %s98 = sphi 0, %s97
      %s112 = sphi 0, %s98
      %s116 = sphi 0, %s116
      %s118 = sphi 0, %s116
      %s119 = sphi 0, %s118
      %s133 = sphi 0, %s119
      %s137 = sphi 0, %s137
      %s139 = sphi 0, %s137
      %s140 = sphi 0, %s139
      %s154 = sphi 0, %s140
      %s158 = sphi 0, %s158
      %s160 = sphi 0, %s158
      %s161 = sphi 0, %s160
      %s175 = sphi 0, %s161
      %s179 = sphi 0, %s179
      %s181 = sphi 0, %s179
      %s182 = sphi 0, %s181
      %s196 = sphi 0, %s182
      %s200 = sphi 0, %s200
      %s202 = sphi 0, %s200
      %s203 = sphi 0, %s202
      %s217 = sphi 0, %s203
      %s221 = sphi 0, %s221
      %s223 = sphi 0, %s221
      %s224 = sphi 0, %s223
      %s238 = sphi 0, %s224
      %s242 = sphi 0, %s242
      %s244 = sphi 0, %s242
      %s245 = sphi 0, %s244
      %s259 = sphi 0, %s245
      %s263 = sphi 0, %s263
      %s265 = sphi 0, %s263
      %s266 = sphi 0, %s265
      %s280 = sphi 0, %s266
      %s284 = sphi 0, %s284
      %s286 = sphi 0, %s284
      %s287 = sphi 0, %s286
      %s301 = sphi 0, %s287
      %s305 = sphi 0, %s305
      %s307 = sphi 0, %s305
      %s308 = sphi 0, %s307
      %s322 = sphi 0, %s308
      %s326 = sphi 0, %s326
      %s328 = sphi 0, %s326
      %s329 = sphi 0, %s328
      %s343 = sphi 0, %s329
      %s347 = sphi 0, %s347
      %s349 = sphi 0, %s347
      %s350 = sphi 0, %s349
      %s364 = sphi 0, %s350
      %s368 = sphi 0, %s368
      %s370 = sphi 0, %s368
      %s371 = sphi 0, %s370
      %s385 = sphi 0, %s371
      %s389 = sphi 0, %s389
      %s391 = sphi 0, %s389
      %s392 = sphi 0, %s391
      %s406 = sphi 0, %s392
      %s410 = sphi 0, %s410
      %s412 = sphi 0, %s410
      %s413 = sphi 0, %s412
      %s427 = sphi 0, %s413
      %s433 = sphi 0, %s435
      %s436 = sphi 0, %s433
      %s437 = sphi 0, %s436
      %s453 = sphi 0, %s437
    $region4: #{tpu_custom_call.1} parent=1 // loop_header_branch
      %38 = sbr.rel (%p36) target = $region8
    $region5: #{tpu_custom_call.1} parent=1 // loop_body
      %s40 = ssub.s32 %s35, 1
      %s41 = ssub.s32 %s35, 2
      %s42 = sadd.s32 %s35, 1
      %s43 = ssub.s32 %s35, %s42
      %p44 = scmp.eq.s32.totalorder %s43, 0
      %s46 = sadd.s32 %s45, 1
      %s47 = scalar_select %p44, %s45, %s46
      %p50 = pneg %p44
      %p51 = scmp.eq.s32.totalorder %s35, 7
      %p52 = por %p50, %p51
      %p53 = scmp.ne.s32.totalorder %s45, %s48
      %p54 = scmp.eq.s32.totalorder %s35, 0
      %p55 = por %p53, %p54
      %p56 = scmp.ne.s32.totalorder %s45, %s48
      %p57 = scmp.eq.s32.totalorder %s40, 7
      %p58 = por %p56, %p57
      %p59 = scmp.ne.s32.totalorder %s48, %s49
      %p60 = scmp.eq.s32.totalorder %s40, 0
      %p61 = por %p59, %p60
      %p62 = scmp.ne.s32.totalorder %s48, %s49
      %p63 = scmp.eq.s32.totalorder %s41, 7
      %p64 = por %p62, %p63
      %p66 = scmp.ne.s32.totalorder %s49, %s65
      %p67 = scmp.eq.s32.totalorder %s41, 0
      %p68 = por %p66, %p67
      %s69 = ssub.s32 %s35, %s42
      %p70 = scmp.eq.s32.totalorder %s69, 0
      %s72 = sadd.s32 %s71, 1
      %s73 = scalar_select %p70, %s71, %s72
      %p76 = pneg %p70
      %p77 = scmp.eq.s32.totalorder %s35, 7
      %p78 = por %p76, %p77
      %p79 = scmp.ne.s32.totalorder %s71, %s74
      %p80 = scmp.eq.s32.totalorder %s35, 0
      %p81 = por %p79, %p80
      %p82 = scmp.ne.s32.totalorder %s71, %s74
      %p83 = scmp.eq.s32.totalorder %s40, 7
      %p84 = por %p82, %p83
      %p85 = scmp.ne.s32.totalorder %s74, %s75
      %p86 = scmp.eq.s32.totalorder %s40, 0
      %p87 = por %p85, %p86
      %p88 = scmp.ne.s32.totalorder %s74, %s75
      %p89 = scmp.eq.s32.totalorder %s41, 7
      %p90 = por %p88, %p89
      %p92 = scmp.ne.s32.totalorder %s75, %s91
      %p93 = scmp.eq.s32.totalorder %s41, 0
      %p94 = por %p92, %p93
      %s96 = sadd.s32 %s95, 1
      %p99 = scmp.eq.s32.totalorder %s35, 7
      %p100 = scmp.ne.s32.totalorder %s95, %s97
      %p101 = scmp.eq.s32.totalorder %s35, 0
      %p102 = por %p100, %p101
      %p103 = scmp.ne.s32.totalorder %s95, %s97
      %p104 = scmp.eq.s32.totalorder %s40, 7
      %p105 = por %p103, %p104
      %p106 = scmp.ne.s32.totalorder %s97, %s98
      %p107 = scmp.eq.s32.totalorder %s40, 0
      %p108 = por %p106, %p107
      %p109 = scmp.ne.s32.totalorder %s97, %s98
      %p110 = scmp.eq.s32.totalorder %s41, 7
      %p111 = por %p109, %p110
      %p113 = scmp.ne.s32.totalorder %s98, %s112
      %p114 = scmp.eq.s32.totalorder %s41, 0
      %p115 = por %p113, %p114
      %s117 = sadd.s32 %s116, 1
      %p120 = scmp.eq.s32.totalorder %s35, 7
      %p121 = scmp.ne.s32.totalorder %s116, %s118
      %p122 = scmp.eq.s32.totalorder %s35, 0
      %p123 = por %p121, %p122
      %p124 = scmp.ne.s32.totalorder %s116, %s118
      %p125 = scmp.eq.s32.totalorder %s40, 7
      %p126 = por %p124, %p125
      %p127 = scmp.ne.s32.totalorder %s118, %s119
      %p128 = scmp.eq.s32.totalorder %s40, 0
      %p129 = por %p127, %p128
      %p130 = scmp.ne.s32.totalorder %s118, %s119
      %p131 = scmp.eq.s32.totalorder %s41, 7
      %p132 = por %p130, %p131
      %p134 = scmp.ne.s32.totalorder %s119, %s133
      %p135 = scmp.eq.s32.totalorder %s41, 0
      %p136 = por %p134, %p135
      %s138 = sadd.s32 %s137, 1
      %p141 = scmp.eq.s32.totalorder %s35, 7
      %p142 = scmp.ne.s32.totalorder %s137, %s139
      %p143 = scmp.eq.s32.totalorder %s35, 0
      %p144 = por %p142, %p143
      %p145 = scmp.ne.s32.totalorder %s137, %s139
      %p146 = scmp.eq.s32.totalorder %s40, 7
      %p147 = por %p145, %p146
      %p148 = scmp.ne.s32.totalorder %s139, %s140
      %p149 = scmp.eq.s32.totalorder %s40, 0
      %p150 = por %p148, %p149
      %p151 = scmp.ne.s32.totalorder %s139, %s140
      %p152 = scmp.eq.s32.totalorder %s41, 7
      %p153 = por %p151, %p152
      %p155 = scmp.ne.s32.totalorder %s140, %s154
      %p156 = scmp.eq.s32.totalorder %s41, 0
      %p157 = por %p155, %p156
      %s159 = sadd.s32 %s158, 1
      %p162 = scmp.eq.s32.totalorder %s35, 7
      %p163 = scmp.ne.s32.totalorder %s158, %s160
      %p164 = scmp.eq.s32.totalorder %s35, 0
      %p165 = por %p163, %p164
      %p166 = scmp.ne.s32.totalorder %s158, %s160
      %p167 = scmp.eq.s32.totalorder %s40, 7
      %p168 = por %p166, %p167
      %p169 = scmp.ne.s32.totalorder %s160, %s161
      %p170 = scmp.eq.s32.totalorder %s40, 0
      %p171 = por %p169, %p170
      %p172 = scmp.ne.s32.totalorder %s160, %s161
      %p173 = scmp.eq.s32.totalorder %s41, 7
      %p174 = por %p172, %p173
      %p176 = scmp.ne.s32.totalorder %s161, %s175
      %p177 = scmp.eq.s32.totalorder %s41, 0
      %p178 = por %p176, %p177
      %s180 = sadd.s32 %s179, 1
      %p183 = scmp.eq.s32.totalorder %s35, 7
      %p184 = scmp.ne.s32.totalorder %s179, %s181
      %p185 = scmp.eq.s32.totalorder %s35, 0
      %p186 = por %p184, %p185
      %p187 = scmp.ne.s32.totalorder %s179, %s181
      %p188 = scmp.eq.s32.totalorder %s40, 7
      %p189 = por %p187, %p188
      %p190 = scmp.ne.s32.totalorder %s181, %s182
      %p191 = scmp.eq.s32.totalorder %s40, 0
      %p192 = por %p190, %p191
      %p193 = scmp.ne.s32.totalorder %s181, %s182
      %p194 = scmp.eq.s32.totalorder %s41, 7
      %p195 = por %p193, %p194
      %p197 = scmp.ne.s32.totalorder %s182, %s196
      %p198 = scmp.eq.s32.totalorder %s41, 0
      %p199 = por %p197, %p198
      %s201 = sadd.s32 %s200, 1
      %p204 = scmp.eq.s32.totalorder %s35, 7
      %p205 = scmp.ne.s32.totalorder %s200, %s202
      %p206 = scmp.eq.s32.totalorder %s35, 0
      %p207 = por %p205, %p206
      %p208 = scmp.ne.s32.totalorder %s200, %s202
      %p209 = scmp.eq.s32.totalorder %s40, 7
      %p210 = por %p208, %p209
      %p211 = scmp.ne.s32.totalorder %s202, %s203
      %p212 = scmp.eq.s32.totalorder %s40, 0
      %p213 = por %p211, %p212
      %p214 = scmp.ne.s32.totalorder %s202, %s203
      %p215 = scmp.eq.s32.totalorder %s41, 7
      %p216 = por %p214, %p215
      %p218 = scmp.ne.s32.totalorder %s203, %s217
      %p219 = scmp.eq.s32.totalorder %s41, 0
      %p220 = por %p218, %p219
      %s222 = sadd.s32 %s221, 1
      %p225 = scmp.eq.s32.totalorder %s35, 7
      %p226 = scmp.ne.s32.totalorder %s221, %s223
      %p227 = scmp.eq.s32.totalorder %s35, 0
      %p228 = por %p226, %p227
      %p229 = scmp.ne.s32.totalorder %s221, %s223
      %p230 = scmp.eq.s32.totalorder %s40, 7
      %p231 = por %p229, %p230
      %p232 = scmp.ne.s32.totalorder %s223, %s224
      %p233 = scmp.eq.s32.totalorder %s40, 0
      %p234 = por %p232, %p233
      %p235 = scmp.ne.s32.totalorder %s223, %s224
      %p236 = scmp.eq.s32.totalorder %s41, 7
      %p237 = por %p235, %p236
      %p239 = scmp.ne.s32.totalorder %s224, %s238
      %p240 = scmp.eq.s32.totalorder %s41, 0
      %p241 = por %p239, %p240
      %s243 = sadd.s32 %s242, 1
      %p246 = scmp.eq.s32.totalorder %s35, 7
      %p247 = scmp.ne.s32.totalorder %s242, %s244
      %p248 = scmp.eq.s32.totalorder %s35, 0
      %p249 = por %p247, %p248
      %p250 = scmp.ne.s32.totalorder %s242, %s244
      %p251 = scmp.eq.s32.totalorder %s40, 7
      %p252 = por %p250, %p251
      %p253 = scmp.ne.s32.totalorder %s244, %s245
      %p254 = scmp.eq.s32.totalorder %s40, 0
      %p255 = por %p253, %p254
      %p256 = scmp.ne.s32.totalorder %s244, %s245
      %p257 = scmp.eq.s32.totalorder %s41, 7
      %p258 = por %p256, %p257
      %p260 = scmp.ne.s32.totalorder %s245, %s259
      %p261 = scmp.eq.s32.totalorder %s41, 0
      %p262 = por %p260, %p261
      %s264 = sadd.s32 %s263, 1
      %p267 = scmp.eq.s32.totalorder %s35, 7
      %p268 = scmp.ne.s32.totalorder %s263, %s265
      %p269 = scmp.eq.s32.totalorder %s35, 0
      %p270 = por %p268, %p269
      %p271 = scmp.ne.s32.totalorder %s263, %s265
      %p272 = scmp.eq.s32.totalorder %s40, 7
      %p273 = por %p271, %p272
      %p274 = scmp.ne.s32.totalorder %s265, %s266
      %p275 = scmp.eq.s32.totalorder %s40, 0
      %p276 = por %p274, %p275
      %p277 = scmp.ne.s32.totalorder %s265, %s266
      %p278 = scmp.eq.s32.totalorder %s41, 7
      %p279 = por %p277, %p278
      %p281 = scmp.ne.s32.totalorder %s266, %s280
      %p282 = scmp.eq.s32.totalorder %s41, 0
      %p283 = por %p281, %p282
      %s285 = sadd.s32 %s284, 1
      %p288 = scmp.eq.s32.totalorder %s35, 7
      %p289 = scmp.ne.s32.totalorder %s284, %s286
      %p290 = scmp.eq.s32.totalorder %s35, 0
      %p291 = por %p289, %p290
      %p292 = scmp.ne.s32.totalorder %s284, %s286
      %p293 = scmp.eq.s32.totalorder %s40, 7
      %p294 = por %p292, %p293
      %p295 = scmp.ne.s32.totalorder %s286, %s287
      %p296 = scmp.eq.s32.totalorder %s40, 0
      %p297 = por %p295, %p296
      %p298 = scmp.ne.s32.totalorder %s286, %s287
      %p299 = scmp.eq.s32.totalorder %s41, 7
      %p300 = por %p298, %p299
      %p302 = scmp.ne.s32.totalorder %s287, %s301
      %p303 = scmp.eq.s32.totalorder %s41, 0
      %p304 = por %p302, %p303
      %s306 = sadd.s32 %s305, 1
      %p309 = scmp.eq.s32.totalorder %s35, 7
      %p310 = scmp.ne.s32.totalorder %s305, %s307
      %p311 = scmp.eq.s32.totalorder %s35, 0
      %p312 = por %p310, %p311
      %p313 = scmp.ne.s32.totalorder %s305, %s307
      %p314 = scmp.eq.s32.totalorder %s40, 7
      %p315 = por %p313, %p314
      %p316 = scmp.ne.s32.totalorder %s307, %s308
      %p317 = scmp.eq.s32.totalorder %s40, 0
      %p318 = por %p316, %p317
      %p319 = scmp.ne.s32.totalorder %s307, %s308
      %p320 = scmp.eq.s32.totalorder %s41, 7
      %p321 = por %p319, %p320
      %p323 = scmp.ne.s32.totalorder %s308, %s322
      %p324 = scmp.eq.s32.totalorder %s41, 0
      %p325 = por %p323, %p324
      %s327 = sadd.s32 %s326, 1
      %p330 = scmp.eq.s32.totalorder %s35, 7
      %p331 = scmp.ne.s32.totalorder %s326, %s328
      %p332 = scmp.eq.s32.totalorder %s35, 0
      %p333 = por %p331, %p332
      %p334 = scmp.ne.s32.totalorder %s326, %s328
      %p335 = scmp.eq.s32.totalorder %s40, 7
      %p336 = por %p334, %p335
      %p337 = scmp.ne.s32.totalorder %s328, %s329
      %p338 = scmp.eq.s32.totalorder %s40, 0
      %p339 = por %p337, %p338
      %p340 = scmp.ne.s32.totalorder %s328, %s329
      %p341 = scmp.eq.s32.totalorder %s41, 7
      %p342 = por %p340, %p341
      %p344 = scmp.ne.s32.totalorder %s329, %s343
      %p345 = scmp.eq.s32.totalorder %s41, 0
      %p346 = por %p344, %p345
      %s348 = sadd.s32 %s347, 1
      %p351 = scmp.eq.s32.totalorder %s35, 7
      %p352 = scmp.ne.s32.totalorder %s347, %s349
      %p353 = scmp.eq.s32.totalorder %s35, 0
      %p354 = por %p352, %p353
      %p355 = scmp.ne.s32.totalorder %s347, %s349
      %p356 = scmp.eq.s32.totalorder %s40, 7
      %p357 = por %p355, %p356
      %p358 = scmp.ne.s32.totalorder %s349, %s350
      %p359 = scmp.eq.s32.totalorder %s40, 0
      %p360 = por %p358, %p359
      %p361 = scmp.ne.s32.totalorder %s349, %s350
      %p362 = scmp.eq.s32.totalorder %s41, 7
      %p363 = por %p361, %p362
      %p365 = scmp.ne.s32.totalorder %s350, %s364
      %p366 = scmp.eq.s32.totalorder %s41, 0
      %p367 = por %p365, %p366
      %s369 = sadd.s32 %s368, 1
      %p372 = scmp.eq.s32.totalorder %s35, 7
      %p373 = scmp.ne.s32.totalorder %s368, %s370
      %p374 = scmp.eq.s32.totalorder %s35, 0
      %p375 = por %p373, %p374
      %p376 = scmp.ne.s32.totalorder %s368, %s370
      %p377 = scmp.eq.s32.totalorder %s40, 7
      %p378 = por %p376, %p377
      %p379 = scmp.ne.s32.totalorder %s370, %s371
      %p380 = scmp.eq.s32.totalorder %s40, 0
      %p381 = por %p379, %p380
      %p382 = scmp.ne.s32.totalorder %s370, %s371
      %p383 = scmp.eq.s32.totalorder %s41, 7
      %p384 = por %p382, %p383
      %p386 = scmp.ne.s32.totalorder %s371, %s385
      %p387 = scmp.eq.s32.totalorder %s41, 0
      %p388 = por %p386, %p387
      %s390 = sadd.s32 %s389, 1
      %p393 = scmp.eq.s32.totalorder %s35, 7
      %p394 = scmp.ne.s32.totalorder %s389, %s391
      %p395 = scmp.eq.s32.totalorder %s35, 0
      %p396 = por %p394, %p395
      %p397 = scmp.ne.s32.totalorder %s389, %s391
      %p398 = scmp.eq.s32.totalorder %s40, 7
      %p399 = por %p397, %p398
      %p400 = scmp.ne.s32.totalorder %s391, %s392
      %p401 = scmp.eq.s32.totalorder %s40, 0
      %p402 = por %p400, %p401
      %p403 = scmp.ne.s32.totalorder %s391, %s392
      %p404 = scmp.eq.s32.totalorder %s41, 7
      %p405 = por %p403, %p404
      %p407 = scmp.ne.s32.totalorder %s392, %s406
      %p408 = scmp.eq.s32.totalorder %s41, 0
      %p409 = por %p407, %p408
      %s411 = sadd.s32 %s410, 1
      %p414 = scmp.eq.s32.totalorder %s35, 7
      %p415 = scmp.ne.s32.totalorder %s410, %s412
      %p416 = scmp.eq.s32.totalorder %s35, 0
      %p417 = por %p415, %p416
      %p418 = scmp.ne.s32.totalorder %s410, %s412
      %p419 = scmp.eq.s32.totalorder %s40, 7
      %p420 = por %p418, %p419
      %p421 = scmp.ne.s32.totalorder %s412, %s413
      %p422 = scmp.eq.s32.totalorder %s40, 0
      %p423 = por %p421, %p422
      %p424 = scmp.ne.s32.totalorder %s412, %s413
      %p425 = scmp.eq.s32.totalorder %s41, 7
      %p426 = por %p424, %p425
      %p428 = scmp.ne.s32.totalorder %s413, %s427
      %p429 = scmp.eq.s32.totalorder %s41, 0
      %p430 = por %p428, %p429
      %s431 = ssub.s32 %s35, %s42
      %p432 = scmp.eq.s32.totalorder %s431, 0
      %s434 = sadd.s32 %s433, 1
      %s435 = scalar_select %p432, %s433, %s434
      %p438 = pneg %p432
      %p439 = scmp.eq.s32.totalorder %s35, 7
      %p440 = por %p438, %p439
      %p441 = scmp.ne.s32.totalorder %s433, %s436
      %p442 = scmp.eq.s32.totalorder %s35, 0
      %p443 = por %p441, %p442
      %p444 = scmp.ne.s32.totalorder %s433, %s436
      %p445 = scmp.eq.s32.totalorder %s40, 7
      %p446 = por %p444, %p445
      %p447 = scmp.ne.s32.totalorder %s436, %s437
      %p448 = scmp.eq.s32.totalorder %s40, 0
      %p449 = por %p447, %p448
      %p450 = scmp.ne.s32.totalorder %s436, %s437
      %p451 = scmp.eq.s32.totalorder %s41, 7
      %p452 = por %p450, %p451
      %p454 = scmp.ne.s32.totalorder %s437, %s453
      %p455 = scmp.eq.s32.totalorder %s41, 0
      %p456 = por %p454, %p455
      %p457 = scmp.le.s32.totalorder 1, %s35
      %p458 = scmp.lt.s32.totalorder %s35, 9
      %p459 = pnand %p457, %p458
      %p460 = pneg %p459
      // Predicated region
      $region9: #{tpu_custom_call.1} parent=5 // pred_check
        _
      $region10: #{tpu_custom_call.1} parent=5 // pred_check_branch
        %462 = sbr.rel (%p459) target = $region12
      $region11: #{tpu_custom_call.1} parent=5 // pred_region
        %s463 = ssub.s32 %s35, 1
        // Predicated region
        $region13: #{tpu_custom_call.1} parent=11 // pred_check
          %p464 = pneg %p108
        $region14: #{tpu_custom_call.1} parent=11 // pred_check_branch
          %466 = sbr.rel (%p464) target = $region16
        $region15: #{tpu_custom_call.1} parent=11 // pred_region
          %s468 = ssub.s32 256, 256
          %469 = vsyncadd [#allocation6], %s468
          %s470 = sshll.u32 [#allocation7], 4
          %s471 = int_to_ptr.vmem [resolvable:$true] %s470
          %476 = dma.hbm_to_vmem [thread:$0]  %s2, 256, %s471, [#allocation6], 64, 64, 4
        $region16: #{tpu_custom_call.1} parent=11 // pred_fallthru
          _
        // Predicated region
        $region17: #{tpu_custom_call.1} parent=11 // pred_check
          %p477 = pneg %p129
        $region18: #{tpu_custom_call.1} parent=11 // pred_check_branch
          %479 = sbr.rel (%p477) target = $region20
        $region19: #{tpu_custom_call.1} parent=11 // pred_region
          _
        $region20: #{tpu_custom_call.1} parent=11 // pred_fallthru
          _
        // Predicated region
        $region21: #{tpu_custom_call.1} parent=11 // pred_check
          %p480 = pneg %p150
        $region22: #{tpu_custom_call.1} parent=11 // pred_check_branch
          %482 = sbr.rel (%p480) target = $region24
        $region23: #{tpu_custom_call.1} parent=11 // pred_region
          %s484 = ssub.s32 256, 256
          %485 = vsyncadd [#allocation9], %s484
          %s486 = sshll.u32 [#allocation8], 4
          %s487 = int_to_ptr.vmem [resolvable:$true] %s486
          %492 = dma.hbm_to_vmem [thread:$0]  %s4, 256, %s487, [#allocation9], 64, 64, 4
        $region24: #{tpu_custom_call.1} parent=11 // pred_fallthru
          _
        // Predicated region
        $region25: #{tpu_custom_call.1} parent=11 // pred_check
          %p493 = pneg %p171
        $region26: #{tpu_custom_call.1} parent=11 // pred_check_branch
          %495 = sbr.rel (%p493) target = $region28
        $region27: #{tpu_custom_call.1} parent=11 // pred_region
          _
        $region28: #{tpu_custom_call.1} parent=11 // pred_fallthru
          _
        // Predicated region
        $region29: #{tpu_custom_call.1} parent=11 // pred_check
          %p496 = pneg %p192
        $region30: #{tpu_custom_call.1} parent=11 // pred_check_branch
          %498 = sbr.rel (%p496) target = $region32
        $region31: #{tpu_custom_call.1} parent=11 // pred_region
          _
        $region32: #{tpu_custom_call.1} parent=11 // pred_fallthru
          _
        // Predicated region
        $region33: #{tpu_custom_call.1} parent=11 // pred_check
          %p499 = pneg %p213
        $region34: #{tpu_custom_call.1} parent=11 // pred_check_branch
          %501 = sbr.rel (%p499) target = $region36
        $region35: #{tpu_custom_call.1} parent=11 // pred_region
          %s503 = ssub.s32 256, 256
          %504 = vsyncadd [#allocation9], %s503
          %s505 = sshll.u32 [#allocation10], 4
          %s506 = int_to_ptr.vmem [resolvable:$true] %s505
          %511 = dma.hbm_to_vmem [thread:$0]  %s7, 256, %s506, [#allocation9], 64, 64, 4
        $region36: #{tpu_custom_call.1} parent=11 // pred_fallthru
          _
        // Predicated region
        $region37: #{tpu_custom_call.1} parent=11 // pred_check
          %p512 = pneg %p234
        $region38: #{tpu_custom_call.1} parent=11 // pred_check_branch
          %514 = sbr.rel (%p512) target = $region40
        $region39: #{tpu_custom_call.1} parent=11 // pred_region
          _
        $region40: #{tpu_custom_call.1} parent=11 // pred_fallthru
          _
        // Predicated region
        $region41: #{tpu_custom_call.1} parent=11 // pred_check
          %p515 = pneg %p255
        $region42: #{tpu_custom_call.1} parent=11 // pred_check_branch
          %517 = sbr.rel (%p515) target = $region44
        $region43: #{tpu_custom_call.1} parent=11 // pred_region
          _
        $region44: #{tpu_custom_call.1} parent=11 // pred_fallthru
          _
        // Predicated region
        $region45: #{tpu_custom_call.1} parent=11 // pred_check
          %p518 = pneg %p276
        $region46: #{tpu_custom_call.1} parent=11 // pred_check_branch
          %520 = sbr.rel (%p518) target = $region48
        $region47: #{tpu_custom_call.1} parent=11 // pred_region
          %s522 = ssub.s32 256, 256
          %523 = vsyncadd [#allocation12], %s522
          %s524 = sshll.u32 [#allocation11], 4
          %s525 = int_to_ptr.vmem [resolvable:$true] %s524
          %530 = dma.hbm_to_vmem [thread:$0]  %s10, 256, %s525, [#allocation12], 64, 64, 4
        $region48: #{tpu_custom_call.1} parent=11 // pred_fallthru
          _
        // Predicated region
        $region49: #{tpu_custom_call.1} parent=11 // pred_check
          %p531 = pneg %p297
        $region50: #{tpu_custom_call.1} parent=11 // pred_check_branch
          %533 = sbr.rel (%p531) target = $region52
        $region51: #{tpu_custom_call.1} parent=11 // pred_region
          _
        $region52: #{tpu_custom_call.1} parent=11 // pred_fallthru
          _
        // Predicated region
        $region53: #{tpu_custom_call.1} parent=11 // pred_check
          %p534 = pneg %p318
        $region54: #{tpu_custom_call.1} parent=11 // pred_check_branch
          %536 = sbr.rel (%p534) target = $region56
        $region55: #{tpu_custom_call.1} parent=11 // pred_region
          _
        $region56: #{tpu_custom_call.1} parent=11 // pred_fallthru
          _
        // Predicated region
        $region57: #{tpu_custom_call.1} parent=11 // pred_check
          %p537 = pneg %p339
        $region58: #{tpu_custom_call.1} parent=11 // pred_check_branch
          %539 = sbr.rel (%p537) target = $region60
        $region59: #{tpu_custom_call.1} parent=11 // pred_region
          %s541 = ssub.s32 256, 256
          %542 = vsyncadd [#allocation12], %s541
          %s543 = sshll.u32 [#allocation13], 4
          %s544 = int_to_ptr.vmem [resolvable:$true] %s543
          %549 = dma.hbm_to_vmem [thread:$0]  %s13, 256, %s544, [#allocation12], 64, 64, 4
        $region60: #{tpu_custom_call.1} parent=11 // pred_fallthru
          _
        // Predicated region
        $region61: #{tpu_custom_call.1} parent=11 // pred_check
          %p550 = pneg %p360
        $region62: #{tpu_custom_call.1} parent=11 // pred_check_branch
          %552 = sbr.rel (%p550) target = $region64
        $region63: #{tpu_custom_call.1} parent=11 // pred_region
          _
        $region64: #{tpu_custom_call.1} parent=11 // pred_fallthru
          _
        // Predicated region
        $region65: #{tpu_custom_call.1} parent=11 // pred_check
          %p553 = pneg %p381
        $region66: #{tpu_custom_call.1} parent=11 // pred_check_branch
          %555 = sbr.rel (%p553) target = $region68
        $region67: #{tpu_custom_call.1} parent=11 // pred_region
          _
        $region68: #{tpu_custom_call.1} parent=11 // pred_fallthru
          _
        // Predicated region
        $region69: #{tpu_custom_call.1} parent=11 // pred_check
          %p556 = pneg %p402
        $region70: #{tpu_custom_call.1} parent=11 // pred_check_branch
          %558 = sbr.rel (%p556) target = $region72
        $region71: #{tpu_custom_call.1} parent=11 // pred_region
          _
        $region72: #{tpu_custom_call.1} parent=11 // pred_fallthru
          _
        // Predicated region
        $region73: #{tpu_custom_call.1} parent=11 // pred_check
          %p559 = pneg %p423
        $region74: #{tpu_custom_call.1} parent=11 // pred_check_branch
          %561 = sbr.rel (%p559) target = $region76
        $region75: #{tpu_custom_call.1} parent=11 // pred_region
          _
        $region76: #{tpu_custom_call.1} parent=11 // pred_fallthru
          _
      $region12: #{tpu_custom_call.1} parent=5 // pred_fallthru
        _
      %p562 = scmp.lt.s32.totalorder %s35, 8
      // Predicated region
      $region77: #{tpu_custom_call.1} parent=5 // pred_check
        %p563 = pneg %p562
      $region78: #{tpu_custom_call.1} parent=5 // pred_check_branch
        %565 = sbr.rel (%p563) target = $region80
      $region79: #{tpu_custom_call.1} parent=5 // pred_region
        // Predicated region
        $region81: #{tpu_custom_call.1} parent=79 // pred_check
          %p566 = pneg %p55
        $region82: #{tpu_custom_call.1} parent=79 // pred_check_branch
          %568 = sbr.rel (%p566) target = $region84
        $region83: #{tpu_custom_call.1} parent=79 // pred_region
          %s569 = sand.u32 %s45, 1
          %s570 = scalar_lea.sflag [#allocation3], %s569
          %s571 = sand.u32 %s45, 1
          %s572 = smul.addr %s571, 8
          %s573 = scalar_lea.vmem [#allocation2], %s572
          %s575 = ssub.s32 128, 128
          %576 = vsyncadd %s570, %s575
          %s577 = smul.addr %s35, 2
          %s578 = smul.addr %s577, 64
          %s579 = scalar_lea.hbm %s0, %s578
          %s580 = sshll.u32 %s573, 4
          %s581 = int_to_ptr.vmem [resolvable:$true] %s580
          %586 = dma.hbm_to_vmem [thread:$0]  %s579, 128, %s581, %s570, 64, 64, 4
        $region84: #{tpu_custom_call.1} parent=79 // pred_fallthru
          _
        // Predicated region
        $region85: #{tpu_custom_call.1} parent=79 // pred_check
          %p587 = pneg %p81
        $region86: #{tpu_custom_call.1} parent=79 // pred_check_branch
          %589 = sbr.rel (%p587) target = $region88
        $region87: #{tpu_custom_call.1} parent=79 // pred_region
          %s590 = sand.u32 %s35, 1
          %s591 = scalar_lea.sflag [#allocation6], %s590
          %s592 = sand.u32 %s71, 1
          %s593 = smul.addr %s592, 8
          %s594 = scalar_lea.vmem [#allocation5], %s593
          %s596 = ssub.s32 128, 128
          %597 = vsyncadd %s591, %s596
          %s598 = smul.addr %s35, 2
          %s599 = smul.addr %s598, 64
          %s600 = scalar_lea.hbm %s1, %s599
          %s601 = sshll.u32 %s594, 4
          %s602 = int_to_ptr.vmem [resolvable:$true] %s601
          %607 = dma.hbm_to_vmem [thread:$0]  %s600, 128, %s602, %s591, 64, 64, 4
        $region88: #{tpu_custom_call.1} parent=79 // pred_fallthru
          _
      $region80: #{tpu_custom_call.1} parent=5 // pred_fallthru
        _
      %p608 = scmp.le.s32.totalorder 1, %s35
      %p609 = scmp.lt.s32.totalorder %s35, 9
      %p610 = pnand %p608, %p609
      %p611 = pneg %p610
      // Predicated region
      $region89: #{tpu_custom_call.1} parent=5 // pred_check
        _
      $region90: #{tpu_custom_call.1} parent=5 // pred_check_branch
        %613 = sbr.rel (%p610) target = $region92
      $region91: #{tpu_custom_call.1} parent=5 // pred_region
        %s614 = ssub.s32 %s35, 1
        %s615 = sand.u32 %s48, 1
        %s616 = scalar_lea.sflag [#allocation3], %s615
        %s617 = sand.u32 %s48, 1
        %s618 = smul.addr %s617, 8
        %s619 = scalar_lea.vmem [#allocation2], %s618
        // Predicated region
        $region93: #{tpu_custom_call.1} parent=91 // pred_check
          %p620 = pneg %p61
        $region94: #{tpu_custom_call.1} parent=91 // pred_check_branch
          %622 = sbr.rel (%p620) target = $region96
        $region95: #{tpu_custom_call.1} parent=91 // pred_region
          %623 = dma.done %s616, 128
        $region96: #{tpu_custom_call.1} parent=91 // pred_fallthru
          _
        %s624 = sand.u32 %s40, 1
        %s625 = scalar_lea.sflag [#allocation6], %s624
        %s626 = sand.u32 %s74, 1
        %s627 = smul.addr %s626, 8
        %s628 = scalar_lea.vmem [#allocation5], %s627
        // Predicated region
        $region97: #{tpu_custom_call.1} parent=91 // pred_check
          %p629 = pneg %p87
        $region98: #{tpu_custom_call.1} parent=91 // pred_check_branch
          %631 = sbr.rel (%p629) target = $region100
        $region99: #{tpu_custom_call.1} parent=91 // pred_region
          %632 = dma.done %s625, 128
        $region100: #{tpu_custom_call.1} parent=91 // pred_fallthru
          _
        // Predicated region
        $region101: #{tpu_custom_call.1} parent=91 // pred_check
          %p633 = pneg %p108
        $region102: #{tpu_custom_call.1} parent=91 // pred_check_branch
          %635 = sbr.rel (%p633) target = $region104
        $region103: #{tpu_custom_call.1} parent=91 // pred_region
          %636 = dma.done [#allocation6], 256
        $region104: #{tpu_custom_call.1} parent=91 // pred_fallthru
          _
        // Predicated region
        $region105: #{tpu_custom_call.1} parent=91 // pred_check
          %p637 = pneg %p150
        $region106: #{tpu_custom_call.1} parent=91 // pred_check_branch
          %639 = sbr.rel (%p637) target = $region108
        $region107: #{tpu_custom_call.1} parent=91 // pred_region
          %640 = dma.done [#allocation9], 256
        $region108: #{tpu_custom_call.1} parent=91 // pred_fallthru
          _
        // Predicated region
        $region109: #{tpu_custom_call.1} parent=91 // pred_check
          %p641 = pneg %p213
        $region110: #{tpu_custom_call.1} parent=91 // pred_check_branch
          %643 = sbr.rel (%p641) target = $region112
        $region111: #{tpu_custom_call.1} parent=91 // pred_region
          %644 = dma.done [#allocation9], 256
        $region112: #{tpu_custom_call.1} parent=91 // pred_fallthru
          _
        // Predicated region
        $region113: #{tpu_custom_call.1} parent=91 // pred_check
          %p645 = pneg %p276
        $region114: #{tpu_custom_call.1} parent=91 // pred_check_branch
          %647 = sbr.rel (%p645) target = $region116
        $region115: #{tpu_custom_call.1} parent=91 // pred_region
          %648 = dma.done [#allocation12], 256
        $region116: #{tpu_custom_call.1} parent=91 // pred_fallthru
          _
        // Predicated region
        $region117: #{tpu_custom_call.1} parent=91 // pred_check
          %p649 = pneg %p339
        $region118: #{tpu_custom_call.1} parent=91 // pred_check_branch
          %651 = sbr.rel (%p649) target = $region120
        $region119: #{tpu_custom_call.1} parent=91 // pred_region
          %652 = dma.done [#allocation12], 256
        $region120: #{tpu_custom_call.1} parent=91 // pred_fallthru
          _
        %s653 = sand.u32 %s48, 1
        %s654 = scalar_lea.sflag [#allocation3], %s653
        %s655 = sand.u32 %s48, 1
        %s656 = smul.addr %s655, 8
        %s657 = scalar_lea.vmem [#allocation2], %s656
        %p658 = pneg %p61
        %p659 = pneg %p58
        %s660 = sand.u32 %s40, 1
        %s661 = scalar_lea.sflag [#allocation6], %s660
        %s662 = sand.u32 %s74, 1
        %s663 = smul.addr %s662, 8
        %s664 = scalar_lea.vmem [#allocation5], %s663
        %p665 = pneg %p87
        %p666 = pneg %p84
        %p667 = pneg %p108
        %p668 = pneg %p105
        %p669 = pneg %p129
        %p670 = pneg %p126
        %p671 = pneg %p150
        %p672 = pneg %p147
        %p673 = pneg %p171
        %p674 = pneg %p168
        %p675 = pneg %p192
        %p676 = pneg %p189
        %p677 = pneg %p213
        %p678 = pneg %p210
        %p679 = pneg %p234
        %p680 = pneg %p231
        %p681 = pneg %p255
        %p682 = pneg %p252
        %p683 = pneg %p276
        %p684 = pneg %p273
        %p685 = pneg %p297
        %p686 = pneg %p294
        %p687 = pneg %p318
        %p688 = pneg %p315
        %p689 = pneg %p339
        %p690 = pneg %p336
        %p691 = pneg %p360
        %p692 = pneg %p357
        %p693 = pneg %p381
        %p694 = pneg %p378
        %p695 = pneg %p402
        %p696 = pneg %p399
        %p697 = pneg %p423
        %p698 = pneg %p420
        %p699 = pneg %p449
        %p700 = pneg %p446
        %s701 = sand.u32 %s436, 1
        %s702 = scalar_lea.sflag [#allocation4], %s701
        %s703 = sand.u32 %s436, 1
        %s704 = smul.addr %s703, 8
        %s705 = scalar_lea.vmem [#allocation14], %s704
        %v707 = vld [vmem:[%s619] sm:$0xf]
        %v708 = vld [vmem:[%s619 + $0x4] sm:$0xf]
        %v709 = vld [vmem:[%s628] sm:$0xf]
        %v710 = vld [vmem:[%s628 + $0x4] sm:$0xf]
        %v711 = vld [vmem:[#allocation7] sm:$0xf]
        %v712 = vld [vmem:[#allocation7 + $0x4] sm:$0xf]
        %v713 = vld [vmem:[#allocation7 + $0x8] sm:$0xf]
        %v714 = vld [vmem:[#allocation7 + $0xc] sm:$0xf]
        %v715 = vld [vmem:[%s3] sm:$0x1]
        %v717 = vlaneseq
        %v718 = vshrl.u32 %v717, 7
        %v719 = vsub.s32 0, %v718
        %v720 = vrot.slane %v715, %v719
        %v724 = vunpack.c.l.b16 %v709
        %v725 = vunpack.c.l.b16 %v710
        %v726 = vpack.c.b16 %v725, %v724
        %v731 = vunpack.c.l.b16 %v711
        %v732 = vunpack.c.l.b16 %v712
        %v733 = vunpack.c.l.b16 %v713
        %v734 = vunpack.c.l.b16 %v714
        %v735 = vpack.c.b16 %v732, %v731
        %v736 = vpack.c.b16 %v734, %v733
        %vm739 = vcmask 261120
        %v741 = vsel %vm739, %v726, 0
        %743 = vmatprep.subr.bf16.mxu0 0
        %744 = vmatpush1.bf16.msra.mxu0 %v735
        %745 = vmatprep.subr.bf16.mxu0 0
        %746 = vmatpush1.bf16.msra.mxu0 %v736
        %747 = vmatprep.subr.bf16.mxu0 0
        %748 = vmatpush1.bf16.msra.mxu0 0
        %749 = vmatprep.subr.bf16.mxu0 0
        %750 = vmatpush1.bf16.msra.mxu0 0
        %751 = vmatprep.subr.bf16.mxu0 0
        %752 = vmatpush1.bf16.msra.mxu0 0
        %753 = vmatprep.subr.bf16.mxu0 0
        %754 = vmatpush1.bf16.msra.mxu0 0
        %755 = vmatprep.subr.bf16.mxu0 0
        %756 = vmatpush1.bf16.msra.mxu0 0
        %757 = vmatprep.subr.bf16.mxu0 0
        %758 = vmatpush1.bf16.msra.mxu0 0
        %759 = vmatprep.subr.bf16.mxu0 0
        %760 = vmatpush1.bf16.msra.mxu0 0
        %761 = vmatprep.subr.bf16.mxu0 0
        %762 = vmatpush1.bf16.msra.mxu0 0
        %763 = vmatprep.subr.bf16.mxu0 0
        %764 = vmatpush1.bf16.msra.mxu0 0
        %765 = vmatprep.subr.bf16.mxu0 0
        %766 = vmatpush1.bf16.msra.mxu0 0
        %767 = vmatprep.subr.bf16.mxu0 0
        %768 = vmatpush1.bf16.msra.mxu0 0
        %769 = vmatprep.subr.bf16.mxu0 0
        %770 = vmatpush1.bf16.msra.mxu0 0
        %771 = vmatprep.subr.bf16.mxu0 0
        %772 = vmatpush1.bf16.msra.mxu0 0
        %773 = vmatprep.subr.bf16.mxu0 0
        %774 = vmatpush1.bf16.msra.mxu0 0
        %775 = vmatprep.mubr.bf16.mxu0 0
        %776 = vmatmul.mubr.bf16.gmra.mrb[0].mxu0 %v741
        %v777 = vpop.f32.mrb[0].mxu0
        %v778 = vadd.f32 %v720, %v777
        %v779 = vpop.f32.mrb[0].mxu0
        %v780 = vpop.f32.mrb[0].mxu0
        %v781 = vadd.f32 %v720, %v780
        %v782 = vpop.f32.mrb[0].mxu0
        %783 = vdwg.mxu0
        %v784 = vsel %vm739, %v778, 0.0
        %v785 = vsel %vm739, %v781, 0.0
        %v786 = vadd.f32 %v784, %v785
        %v787 = vrot.slane %v786, 4
        %v788 = vadd.f32 %v786, %v787
        %v789 = vrot.slane %v788, 2
        %v790 = vadd.f32 %v788, %v789
        %v791 = vrot.slane %v790, 1
        %v792 = vadd.f32 %v790, %v791
        %v793 = vpack.c.bf16 %v781, %v778
        %v796 = vunpack.c.l.b16 %v707
        %v797 = vunpack.c.l.b16 %v708
        %v798 = vpack.c.b16 %v797, %v796
        %vm799 = vcmask 130048
        %v801 = vsel %vm799, %v798, 0
        %803 = vmatprep.subr.bf16.mxu0 0
        %804 = vmatpush1.bf16.msra.mxu0 %v793
        %805 = vmatprep.subr.bf16.mxu0 0
        %806 = vmatpush1.bf16.msra.mxu0 0
        %807 = vmatprep.subr.bf16.mxu0 0
        %808 = vmatpush1.bf16.msra.mxu0 0
        %809 = vmatprep.subr.bf16.mxu0 0
        %810 = vmatpush1.bf16.msra.mxu0 0
        %811 = vmatprep.subr.bf16.mxu0 0
        %812 = vmatpush1.bf16.msra.mxu0 0
        %813 = vmatprep.subr.bf16.mxu0 0
        %814 = vmatpush1.bf16.msra.mxu0 0
        %815 = vmatprep.subr.bf16.mxu0 0
        %816 = vmatpush1.bf16.msra.mxu0 0
        %817 = vmatprep.subr.bf16.mxu0 0
        %818 = vmatpush1.bf16.msra.mxu0 0
        %819 = vmatprep.subr.bf16.mxu0 0
        %820 = vmatpush1.bf16.msra.mxu0 0
        %821 = vmatprep.subr.bf16.mxu0 0
        %822 = vmatpush1.bf16.msra.mxu0 0
        %823 = vmatprep.subr.bf16.mxu0 0
        %824 = vmatpush1.bf16.msra.mxu0 0
        %825 = vmatprep.subr.bf16.mxu0 0
        %826 = vmatpush1.bf16.msra.mxu0 0
        %827 = vmatprep.subr.bf16.mxu0 0
        %828 = vmatpush1.bf16.msra.mxu0 0
        %829 = vmatprep.subr.bf16.mxu0 0
        %830 = vmatpush1.bf16.msra.mxu0 0
        %831 = vmatprep.subr.bf16.mxu0 0
        %832 = vmatpush1.bf16.msra.mxu0 0
        %833 = vmatprep.subr.bf16.mxu0 0
        %834 = vmatpush1.bf16.msra.mxu0 0
        %835 = vmatprep.mubr.bf16.mxu0 0
        %836 = vmatmul.mubr.bf16.gmra.mrb[0].mxu0 %v801
        %v837 = vpop.f32.mrb[0].mxu0
        %v838 = vadd.f32 %v778, %v837
        %v839 = vpop.f32.mrb[0].mxu0
        %v840 = vpop.f32.mrb[0].mxu0
        %v841 = vadd.f32 %v781, %v840
        %v842 = vpop.f32.mrb[0].mxu0
        %843 = vdwg.mxu0
        %v844 = vpack.c.bf16 %v841, %v838
        %v845 = vld [vmem:[#allocation8] sm:$0xf]
        %v846 = vld [vmem:[#allocation8 + $0x4] sm:$0xf]
        %v847 = vld [vmem:[#allocation8 + $0x8] sm:$0xf]
        %v848 = vld [vmem:[#allocation8 + $0xc] sm:$0xf]
        %v853 = vunpack.c.l.b16 %v845
        %v854 = vunpack.c.l.b16 %v846
        %v855 = vunpack.c.l.b16 %v847
        %v856 = vunpack.c.l.b16 %v848
        %v857 = vpack.c.b16 %v854, %v853
        %v858 = vpack.c.b16 %v856, %v855
        %v862 = vsel %vm739, %v844, 0
        %864 = vmatprep.subr.bf16.mxu0 0
        %865 = vmatpush1.bf16.msra.mxu0 %v857
        %866 = vmatprep.subr.bf16.mxu0 0
        %867 = vmatpush1.bf16.msra.mxu0 %v858
        %868 = vmatprep.subr.bf16.mxu0 0
        %869 = vmatpush1.bf16.msra.mxu0 0
        %870 = vmatprep.subr.bf16.mxu0 0
        %871 = vmatpush1.bf16.msra.mxu0 0
        %872 = vmatprep.subr.bf16.mxu0 0
        %873 = vmatpush1.bf16.msra.mxu0 0
        %874 = vmatprep.subr.bf16.mxu0 0
        %875 = vmatpush1.bf16.msra.mxu0 0
        %876 = vmatprep.subr.bf16.mxu0 0
        %877 = vmatpush1.bf16.msra.mxu0 0
        %878 = vmatprep.subr.bf16.mxu0 0
        %879 = vmatpush1.bf16.msra.mxu0 0
        %880 = vmatprep.subr.bf16.mxu0 0
        %881 = vmatpush1.bf16.msra.mxu0 0
        %882 = vmatprep.subr.bf16.mxu0 0
        %883 = vmatpush1.bf16.msra.mxu0 0
        %884 = vmatprep.subr.bf16.mxu0 0
        %885 = vmatpush1.bf16.msra.mxu0 0
        %886 = vmatprep.subr.bf16.mxu0 0
        %887 = vmatpush1.bf16.msra.mxu0 0
        %888 = vmatprep.subr.bf16.mxu0 0
        %889 = vmatpush1.bf16.msra.mxu0 0
        %890 = vmatprep.subr.bf16.mxu0 0
        %891 = vmatpush1.bf16.msra.mxu0 0
        %892 = vmatprep.subr.bf16.mxu0 0
        %893 = vmatpush1.bf16.msra.mxu0 0
        %894 = vmatprep.subr.bf16.mxu0 0
        %895 = vmatpush1.bf16.msra.mxu0 0
        %896 = vmatprep.mubr.bf16.mxu0 0
        %897 = vmatmul.mubr.bf16.gmra.mrb[0].mxu0 %v862
        %v898 = vpop.f32.mrb[0].mxu0
        %v899 = vadd.f32 0.0, %v898
        %v900 = vpop.f32.mrb[0].mxu0
        %v901 = vpop.f32.mrb[0].mxu0
        %v902 = vadd.f32 0.0, %v901
        %v903 = vpop.f32.mrb[0].mxu0
        %904 = vdwg.mxu0
        %v905 = vsel %vm739, %v899, 0.0
        %v906 = vsel %vm739, %v902, 0.0
        %v907 = vadd.f32 %v905, %v906
        %v908 = vrot.slane %v907, 4
        %v909 = vadd.f32 %v907, %v908
        %v910 = vrot.slane %v909, 2
        %v911 = vadd.f32 %v909, %v910
        %v912 = vrot.slane %v911, 1
        %v913 = vadd.f32 %v911, %v912
        %v914 = vmul.f32 %v913, 0.0625
        %v915 = vmul.f32 %v899, %v899
        %v916 = vmul.f32 %v902, %v902
        %v917 = vsel %vm739, %v915, 0.0
        %v918 = vsel %vm739, %v916, 0.0
        %v919 = vadd.f32 %v917, %v918
        %v920 = vrot.slane %v919, 4
        %v921 = vadd.f32 %v919, %v920
        %v922 = vrot.slane %v921, 2
        %v923 = vadd.f32 %v921, %v922
        %v924 = vrot.slane %v923, 1
        %v925 = vadd.f32 %v923, %v924
        %v926 = vmul.f32 %v925, 0.0625
        %v927 = vmul.f32 %v914, %v914
        %v928 = vsub.f32 %v926, %v927
        %v929 = vmax.f32 %v928, 0.0
        %v930 = vld [vmem:[%s5] sm:$0x1]
        %v931 = vadd.f32 %v929, 1e-05
        %v932 = vrsqrt.pop %v931
        %v933 = vmul.f32 %v930, %v932
        %v934 = vld [vmem:[%s6] sm:$0x1]
        %v935 = vmul.f32 %v914, %v933
        %v936 = vsub.f32 %v934, %v935
        %v938 = vlaneseq
        %v939 = vshrl.u32 %v938, 7
        %v940 = vsub.s32 0, %v939
        %v941 = vrot.slane %v933, %v940
        %v943 = vmul.f32 %v899, %v941
        %v944 = vmul.f32 %v902, %v941
        %v946 = vlaneseq
        %v947 = vshrl.u32 %v946, 7
        %v948 = vsub.s32 0, %v947
        %v949 = vrot.slane %v936, %v948
        %v951 = vadd.f32 %v943, %v949
        %v952 = vadd.f32 %v944, %v949
        %v953 = vmax.f32 %v951, 0.0
        %v954 = vmax.f32 %v952, 0.0
        %v955 = vpack.c.bf16 %v954, %v953
        %v956 = vld [vmem:[#allocation10] sm:$0xf]
        %v957 = vld [vmem:[#allocation10 + $0x4] sm:$0xf]
        %v958 = vld [vmem:[#allocation10 + $0x8] sm:$0xf]
        %v959 = vld [vmem:[#allocation10 + $0xc] sm:$0xf]
        %v964 = vunpack.c.l.b16 %v956
        %v965 = vunpack.c.l.b16 %v957
        %v966 = vunpack.c.l.b16 %v958
        %v967 = vunpack.c.l.b16 %v959
        %v968 = vpack.c.b16 %v965, %v964
        %v969 = vpack.c.b16 %v967, %v966
        %v973 = vsel %vm739, %v955, 0
        %975 = vmatprep.subr.bf16.mxu0 0
        %976 = vmatpush1.bf16.msra.mxu0 %v968
        %977 = vmatprep.subr.bf16.mxu0 0
        %978 = vmatpush1.bf16.msra.mxu0 %v969
        %979 = vmatprep.subr.bf16.mxu0 0
        %980 = vmatpush1.bf16.msra.mxu0 0
        %981 = vmatprep.subr.bf16.mxu0 0
        %982 = vmatpush1.bf16.msra.mxu0 0
        %983 = vmatprep.subr.bf16.mxu0 0
        %984 = vmatpush1.bf16.msra.mxu0 0
        %985 = vmatprep.subr.bf16.mxu0 0
        %986 = vmatpush1.bf16.msra.mxu0 0
        %987 = vmatprep.subr.bf16.mxu0 0
        %988 = vmatpush1.bf16.msra.mxu0 0
        %989 = vmatprep.subr.bf16.mxu0 0
        %990 = vmatpush1.bf16.msra.mxu0 0
        %991 = vmatprep.subr.bf16.mxu0 0
        %992 = vmatpush1.bf16.msra.mxu0 0
        %993 = vmatprep.subr.bf16.mxu0 0
        %994 = vmatpush1.bf16.msra.mxu0 0
        %995 = vmatprep.subr.bf16.mxu0 0
        %996 = vmatpush1.bf16.msra.mxu0 0
        %997 = vmatprep.subr.bf16.mxu0 0
        %998 = vmatpush1.bf16.msra.mxu0 0
        %999 = vmatprep.subr.bf16.mxu0 0
        %1000 = vmatpush1.bf16.msra.mxu0 0
        %1001 = vmatprep.subr.bf16.mxu0 0
        %1002 = vmatpush1.bf16.msra.mxu0 0
        %1003 = vmatprep.subr.bf16.mxu0 0
        %1004 = vmatpush1.bf16.msra.mxu0 0
        %1005 = vmatprep.subr.bf16.mxu0 0
        %1006 = vmatpush1.bf16.msra.mxu0 0
        %1007 = vmatprep.mubr.bf16.mxu0 0
        %1008 = vmatmul.mubr.bf16.gmra.mrb[0].mxu0 %v973
        %v1009 = vpop.f32.mrb[0].mxu0
        %v1010 = vadd.f32 0.0, %v1009
        %v1011 = vpop.f32.mrb[0].mxu0
        %v1012 = vpop.f32.mrb[0].mxu0
        %v1013 = vadd.f32 0.0, %v1012
        %v1014 = vpop.f32.mrb[0].mxu0
        %1015 = vdwg.mxu0
        %v1016 = vsel %vm739, %v1010, 0.0
        %v1017 = vsel %vm739, %v1013, 0.0
        %v1018 = vadd.f32 %v1016, %v1017
        %v1019 = vrot.slane %v1018, 4
        %v1020 = vadd.f32 %v1018, %v1019
        %v1021 = vrot.slane %v1020, 2
        %v1022 = vadd.f32 %v1020, %v1021
        %v1023 = vrot.slane %v1022, 1
        %v1024 = vadd.f32 %v1022, %v1023
        %v1025 = vmul.f32 %v1024, 0.0625
        %v1026 = vmul.f32 %v1010, %v1010
        %v1027 = vmul.f32 %v1013, %v1013
        %v1028 = vsel %vm739, %v1026, 0.0
        %v1029 = vsel %vm739, %v1027, 0.0
        %v1030 = vadd.f32 %v1028, %v1029
        %v1031 = vrot.slane %v1030, 4
        %v1032 = vadd.f32 %v1030, %v1031
        %v1033 = vrot.slane %v1032, 2
        %v1034 = vadd.f32 %v1032, %v1033
        %v1035 = vrot.slane %v1034, 1
        %v1036 = vadd.f32 %v1034, %v1035
        %v1037 = vmul.f32 %v1036, 0.0625
        %v1038 = vmul.f32 %v1025, %v1025
        %v1039 = vsub.f32 %v1037, %v1038
        %v1040 = vmax.f32 %v1039, 0.0
        %v1041 = vld [vmem:[%s8] sm:$0x1]
        %v1042 = vadd.f32 %v1040, 1e-05
        %v1043 = vrsqrt.pop %v1042
        %v1044 = vmul.f32 %v1041, %v1043
        %v1045 = vld [vmem:[%s9] sm:$0x1]
        %v1046 = vmul.f32 %v1025, %v1044
        %v1047 = vsub.f32 %v1045, %v1046
        %v1049 = vlaneseq
        %v1050 = vshrl.u32 %v1049, 7
        %v1051 = vsub.s32 0, %v1050
        %v1052 = vrot.slane %v1044, %v1051
        %v1054 = vmul.f32 %v1010, %v1052
        %v1055 = vmul.f32 %v1013, %v1052
        %v1057 = vlaneseq
        %v1058 = vshrl.u32 %v1057, 7
        %v1059 = vsub.s32 0, %v1058
        %v1060 = vrot.slane %v1047, %v1059
        %v1062 = vadd.f32 %v1054, %v1060
        %v1063 = vadd.f32 %v1055, %v1060
        %v1064 = vmax.f32 %v1062, 0.0
        %v1065 = vmax.f32 %v1063, 0.0
        %v1066 = vsel %vm739, %v1064, 0.0
        %v1067 = vsel %vm739, %v1065, 0.0
        %v1068 = vadd.f32 %v1066, %v1067
        %v1069 = vrot.slane %v1068, 4
        %v1070 = vadd.f32 %v1068, %v1069
        %v1071 = vrot.slane %v1070, 2
        %v1072 = vadd.f32 %v1070, %v1071
        %v1073 = vrot.slane %v1072, 1
        %v1074 = vadd.f32 %v1072, %v1073
        %v1075 = vpack.c.bf16 %v1065, %v1064
        %1076 = vmatprep.subr.bf16.mxu0 0
        %1077 = vmatpush1.bf16.msra.mxu0 %v1075
        %1078 = vmatprep.subr.bf16.mxu0 0
        %1079 = vmatpush1.bf16.msra.mxu0 0
        %1080 = vmatprep.subr.bf16.mxu0 0
        %1081 = vmatpush1.bf16.msra.mxu0 0
        %1082 = vmatprep.subr.bf16.mxu0 0
        %1083 = vmatpush1.bf16.msra.mxu0 0
        %1084 = vmatprep.subr.bf16.mxu0 0
        %1085 = vmatpush1.bf16.msra.mxu0 0
        %1086 = vmatprep.subr.bf16.mxu0 0
        %1087 = vmatpush1.bf16.msra.mxu0 0
        %1088 = vmatprep.subr.bf16.mxu0 0
        %1089 = vmatpush1.bf16.msra.mxu0 0
        %1090 = vmatprep.subr.bf16.mxu0 0
        %1091 = vmatpush1.bf16.msra.mxu0 0
        %1092 = vmatprep.subr.bf16.mxu0 0
        %1093 = vmatpush1.bf16.msra.mxu0 0
        %1094 = vmatprep.subr.bf16.mxu0 0
        %1095 = vmatpush1.bf16.msra.mxu0 0
        %1096 = vmatprep.subr.bf16.mxu0 0
        %1097 = vmatpush1.bf16.msra.mxu0 0
        %1098 = vmatprep.subr.bf16.mxu0 0
        %1099 = vmatpush1.bf16.msra.mxu0 0
        %1100 = vmatprep.subr.bf16.mxu0 0
        %1101 = vmatpush1.bf16.msra.mxu0 0
        %1102 = vmatprep.subr.bf16.mxu0 0
        %1103 = vmatpush1.bf16.msra.mxu0 0
        %1104 = vmatprep.subr.bf16.mxu0 0
        %1105 = vmatpush1.bf16.msra.mxu0 0
        %1106 = vmatprep.subr.bf16.mxu0 0
        %1107 = vmatpush1.bf16.msra.mxu0 0
        %1108 = vmatprep.mubr.bf16.mxu0 0
        %1109 = vmatmul.mubr.bf16.gmra.mrb[0].mxu0 %v801
        %v1110 = vpop.f32.mrb[0].mxu0
        %v1111 = vadd.f32 %v1064, %v1110
        %v1112 = vpop.f32.mrb[0].mxu0
        %v1113 = vpop.f32.mrb[0].mxu0
        %v1114 = vadd.f32 %v1065, %v1113
        %v1115 = vpop.f32.mrb[0].mxu0
        %1116 = vdwg.mxu0
        %v1117 = vpack.c.bf16 %v1114, %v1111
        %v1118 = vld [vmem:[#allocation11] sm:$0xf]
        %v1119 = vld [vmem:[#allocation11 + $0x4] sm:$0xf]
        %v1120 = vld [vmem:[#allocation11 + $0x8] sm:$0xf]
        %v1121 = vld [vmem:[#allocation11 + $0xc] sm:$0xf]
        %v1126 = vunpack.c.l.b16 %v1118
        %v1127 = vunpack.c.l.b16 %v1119
        %v1128 = vunpack.c.l.b16 %v1120
        %v1129 = vunpack.c.l.b16 %v1121
        %v1130 = vpack.c.b16 %v1127, %v1126
        %v1131 = vpack.c.b16 %v1129, %v1128
        %v1135 = vsel %vm739, %v1117, 0
        %1137 = vmatprep.subr.bf16.mxu0 0
        %1138 = vmatpush1.bf16.msra.mxu0 %v1130
        %1139 = vmatprep.subr.bf16.mxu0 0
        %1140 = vmatpush1.bf16.msra.mxu0 %v1131
        %1141 = vmatprep.subr.bf16.mxu0 0
        %1142 = vmatpush1.bf16.msra.mxu0 0
        %1143 = vmatprep.subr.bf16.mxu0 0
        %1144 = vmatpush1.bf16.msra.mxu0 0
        %1145 = vmatprep.subr.bf16.mxu0 0
        %1146 = vmatpush1.bf16.msra.mxu0 0
        %1147 = vmatprep.subr.bf16.mxu0 0
        %1148 = vmatpush1.bf16.msra.mxu0 0
        %1149 = vmatprep.subr.bf16.mxu0 0
        %1150 = vmatpush1.bf16.msra.mxu0 0
        %1151 = vmatprep.subr.bf16.mxu0 0
        %1152 = vmatpush1.bf16.msra.mxu0 0
        %1153 = vmatprep.subr.bf16.mxu0 0
        %1154 = vmatpush1.bf16.msra.mxu0 0
        %1155 = vmatprep.subr.bf16.mxu0 0
        %1156 = vmatpush1.bf16.msra.mxu0 0
        %1157 = vmatprep.subr.bf16.mxu0 0
        %1158 = vmatpush1.bf16.msra.mxu0 0
        %1159 = vmatprep.subr.bf16.mxu0 0
        %1160 = vmatpush1.bf16.msra.mxu0 0
        %1161 = vmatprep.subr.bf16.mxu0 0
        %1162 = vmatpush1.bf16.msra.mxu0 0
        %1163 = vmatprep.subr.bf16.mxu0 0
        %1164 = vmatpush1.bf16.msra.mxu0 0
        %1165 = vmatprep.subr.bf16.mxu0 0
        %1166 = vmatpush1.bf16.msra.mxu0 0
        %1167 = vmatprep.subr.bf16.mxu0 0
        %1168 = vmatpush1.bf16.msra.mxu0 0
        %1169 = vmatprep.mubr.bf16.mxu0 0
        %1170 = vmatmul.mubr.bf16.gmra.mrb[0].mxu0 %v1135
        %v1171 = vpop.f32.mrb[0].mxu0
        %v1172 = vadd.f32 0.0, %v1171
        %v1173 = vpop.f32.mrb[0].mxu0
        %v1174 = vpop.f32.mrb[0].mxu0
        %v1175 = vadd.f32 0.0, %v1174
        %v1176 = vpop.f32.mrb[0].mxu0
        %1177 = vdwg.mxu0
        %v1178 = vsel %vm739, %v1172, 0.0
        %v1179 = vsel %vm739, %v1175, 0.0
        %v1180 = vadd.f32 %v1178, %v1179
        %v1181 = vrot.slane %v1180, 4
        %v1182 = vadd.f32 %v1180, %v1181
        %v1183 = vrot.slane %v1182, 2
        %v1184 = vadd.f32 %v1182, %v1183
        %v1185 = vrot.slane %v1184, 1
        %v1186 = vadd.f32 %v1184, %v1185
        %v1187 = vmul.f32 %v1186, 0.0625
        %v1188 = vmul.f32 %v1172, %v1172
        %v1189 = vmul.f32 %v1175, %v1175
        %v1190 = vsel %vm739, %v1188, 0.0
        %v1191 = vsel %vm739, %v1189, 0.0
        %v1192 = vadd.f32 %v1190, %v1191
        %v1193 = vrot.slane %v1192, 4
        %v1194 = vadd.f32 %v1192, %v1193
        %v1195 = vrot.slane %v1194, 2
        %v1196 = vadd.f32 %v1194, %v1195
        %v1197 = vrot.slane %v1196, 1
        %v1198 = vadd.f32 %v1196, %v1197
        %v1199 = vmul.f32 %v1198, 0.0625
        %v1200 = vmul.f32 %v1187, %v1187
        %v1201 = vsub.f32 %v1199, %v1200
        %v1202 = vmax.f32 %v1201, 0.0
        %v1203 = vld [vmem:[%s11] sm:$0x1]
        %v1204 = vadd.f32 %v1202, 1e-05
        %v1205 = vrsqrt.pop %v1204
        %v1206 = vmul.f32 %v1203, %v1205
        %v1207 = vld [vmem:[%s12] sm:$0x1]
        %v1208 = vmul.f32 %v1187, %v1206
        %v1209 = vsub.f32 %v1207, %v1208
        %v1211 = vlaneseq
        %v1212 = vshrl.u32 %v1211, 7
        %v1213 = vsub.s32 0, %v1212
        %v1214 = vrot.slane %v1206, %v1213
        %v1216 = vmul.f32 %v1172, %v1214
        %v1217 = vmul.f32 %v1175, %v1214
        %v1219 = vlaneseq
        %v1220 = vshrl.u32 %v1219, 7
        %v1221 = vsub.s32 0, %v1220
        %v1222 = vrot.slane %v1209, %v1221
        %v1224 = vadd.f32 %v1216, %v1222
        %v1225 = vadd.f32 %v1217, %v1222
        %v1226 = vmax.f32 %v1224, 0.0
        %v1227 = vmax.f32 %v1225, 0.0
        %v1228 = vpack.c.bf16 %v1227, %v1226
        %v1229 = vld [vmem:[#allocation13] sm:$0xf]
        %v1230 = vld [vmem:[#allocation13 + $0x4] sm:$0xf]
        %v1231 = vld [vmem:[#allocation13 + $0x8] sm:$0xf]
        %v1232 = vld [vmem:[#allocation13 + $0xc] sm:$0xf]
        %v1237 = vunpack.c.l.b16 %v1229
        %v1238 = vunpack.c.l.b16 %v1230
        %v1239 = vunpack.c.l.b16 %v1231
        %v1240 = vunpack.c.l.b16 %v1232
        %v1241 = vpack.c.b16 %v1238, %v1237
        %v1242 = vpack.c.b16 %v1240, %v1239
        %v1246 = vsel %vm739, %v1228, 0
        %1248 = vmatprep.subr.bf16.mxu0 0
        %1249 = vmatpush1.bf16.msra.mxu0 %v1241
        %1250 = vmatprep.subr.bf16.mxu0 0
        %1251 = vmatpush1.bf16.msra.mxu0 %v1242
        %1252 = vmatprep.subr.bf16.mxu0 0
        %1253 = vmatpush1.bf16.msra.mxu0 0
        %1254 = vmatprep.subr.bf16.mxu0 0
        %1255 = vmatpush1.bf16.msra.mxu0 0
        %1256 = vmatprep.subr.bf16.mxu0 0
        %1257 = vmatpush1.bf16.msra.mxu0 0
        %1258 = vmatprep.subr.bf16.mxu0 0
        %1259 = vmatpush1.bf16.msra.mxu0 0
        %1260 = vmatprep.subr.bf16.mxu0 0
        %1261 = vmatpush1.bf16.msra.mxu0 0
        %1262 = vmatprep.subr.bf16.mxu0 0
        %1263 = vmatpush1.bf16.msra.mxu0 0
        %1264 = vmatprep.subr.bf16.mxu0 0
        %1265 = vmatpush1.bf16.msra.mxu0 0
        %1266 = vmatprep.subr.bf16.mxu0 0
        %1267 = vmatpush1.bf16.msra.mxu0 0
        %1268 = vmatprep.subr.bf16.mxu0 0
        %1269 = vmatpush1.bf16.msra.mxu0 0
        %1270 = vmatprep.subr.bf16.mxu0 0
        %1271 = vmatpush1.bf16.msra.mxu0 0
        %1272 = vmatprep.subr.bf16.mxu0 0
        %1273 = vmatpush1.bf16.msra.mxu0 0
        %1274 = vmatprep.subr.bf16.mxu0 0
        %1275 = vmatpush1.bf16.msra.mxu0 0
        %1276 = vmatprep.subr.bf16.mxu0 0
        %1277 = vmatpush1.bf16.msra.mxu0 0
        %1278 = vmatprep.subr.bf16.mxu0 0
        %1279 = vmatpush1.bf16.msra.mxu0 0
        %1280 = vmatprep.mubr.bf16.mxu0 0
        %1281 = vmatmul.mubr.bf16.gmra.mrb[0].mxu0 %v1246
        %v1282 = vpop.f32.mrb[0].mxu0
        %v1283 = vadd.f32 0.0, %v1282
        %v1284 = vpop.f32.mrb[0].mxu0
        %v1285 = vpop.f32.mrb[0].mxu0
        %v1286 = vadd.f32 0.0, %v1285
        %v1287 = vpop.f32.mrb[0].mxu0
        %1288 = vdwg.mxu0
        %v1289 = vsel %vm739, %v1283, 0.0
        %v1290 = vsel %vm739, %v1286, 0.0
        %v1291 = vadd.f32 %v1289, %v1290
        %v1292 = vrot.slane %v1291, 4
        %v1293 = vadd.f32 %v1291, %v1292
        %v1294 = vrot.slane %v1293, 2
        %v1295 = vadd.f32 %v1293, %v1294
        %v1296 = vrot.slane %v1295, 1
        %v1297 = vadd.f32 %v1295, %v1296
        %v1298 = vmul.f32 %v1297, 0.0625
        %v1299 = vmul.f32 %v1283, %v1283
        %v1300 = vmul.f32 %v1286, %v1286
        %v1301 = vsel %vm739, %v1299, 0.0
        %v1302 = vsel %vm739, %v1300, 0.0
        %v1303 = vadd.f32 %v1301, %v1302
        %v1304 = vrot.slane %v1303, 4
        %v1305 = vadd.f32 %v1303, %v1304
        %v1306 = vrot.slane %v1305, 2
        %v1307 = vadd.f32 %v1305, %v1306
        %v1308 = vrot.slane %v1307, 1
        %v1309 = vadd.f32 %v1307, %v1308
        %v1310 = vmul.f32 %v1309, 0.0625
        %v1311 = vmul.f32 %v1298, %v1298
        %v1312 = vsub.f32 %v1310, %v1311
        %v1313 = vmax.f32 %v1312, 0.0
        %v1314 = vld [vmem:[%s14] sm:$0x1]
        %v1315 = vadd.f32 %v1313, 1e-05
        %v1316 = vrsqrt.pop %v1315
        %v1317 = vmul.f32 %v1314, %v1316
        %v1318 = vld [vmem:[%s15] sm:$0x1]
        %v1319 = vmul.f32 %v1298, %v1317
        %v1320 = vsub.f32 %v1318, %v1319
        %v1322 = vlaneseq
        %v1323 = vshrl.u32 %v1322, 7
        %v1324 = vsub.s32 0, %v1323
        %v1325 = vrot.slane %v1317, %v1324
        %v1327 = vmul.f32 %v1283, %v1325
        %v1328 = vmul.f32 %v1286, %v1325
        %v1330 = vlaneseq
        %v1331 = vshrl.u32 %v1330, 7
        %v1332 = vsub.s32 0, %v1331
        %v1333 = vrot.slane %v1320, %v1332
        %v1335 = vadd.f32 %v1327, %v1333
        %v1336 = vadd.f32 %v1328, %v1333
        %v1337 = vmax.f32 %v1335, 0.0
        %v1338 = vmax.f32 %v1336, 0.0
        %v1339 = vsel %vm739, %v1337, 0.0
        %v1340 = vsel %vm739, %v1338, 0.0
        %v1341 = vadd.f32 %v1339, %v1340
        %v1342 = vrot.slane %v1341, 4
        %v1343 = vadd.f32 %v1341, %v1342
        %v1344 = vrot.slane %v1343, 2
        %v1345 = vadd.f32 %v1343, %v1344
        %v1346 = vrot.slane %v1345, 1
        %v1347 = vadd.f32 %v1345, %v1346
        %1349 = vrot.lane.b32.xlu0 %v1074, 32
        %v1350 = vpop.permute.xlu0 %1349
        %1353 = vrot.lane.b32.xlu0 %v1347, 64
        %v1354 = vpop.permute.xlu0 %1353
        %v1356 = vsel %vm739, %v792, %v1350
        %vm1357 = vcmask 523264
        %v1358 = vsel %vm1357, %v1356, %v1354
        %v1359 = vpack.c.bf16 %v1358, %v1358
        %v1360 = vld [vmem:[%s16] sm:$0xf]
        %v1361 = vld [vmem:[%s16 + $0x4] sm:$0xf]
        %v1362 = vld [vmem:[%s16 + $0x8] sm:$0xf]
        %v1363 = vld [vmem:[%s16 + $0xc] sm:$0xf]
        %v1364 = vld [vmem:[%s16 + $0x10] sm:$0xf]
        %v1365 = vld [vmem:[%s16 + $0x14] sm:$0xf]
        %v1366 = vld [vmem:[%s16 + $0x18] sm:$0xf]
        %v1367 = vld [vmem:[%s16 + $0x1c] sm:$0xf]
        %v1368 = vld [vmem:[%s16 + $0x20] sm:$0xf]
        %v1369 = vld [vmem:[%s16 + $0x24] sm:$0xf]
        %v1370 = vld [vmem:[%s16 + $0x28] sm:$0xf]
        %v1371 = vld [vmem:[%s16 + $0x2c] sm:$0xf]
        %v1372 = vld [vmem:[%s17] sm:$0x1]
        %v1385 = vunpack.c.l.b16 %v1360
        %v1386 = vunpack.c.l.b16 %v1361
        %v1387 = vunpack.c.l.b16 %v1362
        %v1388 = vunpack.c.l.b16 %v1363
        %v1389 = vunpack.c.l.b16 %v1364
        %v1390 = vunpack.c.l.b16 %v1365
        %v1391 = vunpack.c.l.b16 %v1366
        %v1392 = vunpack.c.l.b16 %v1367
        %v1393 = vunpack.c.l.b16 %v1368
        %v1394 = vunpack.c.l.b16 %v1369
        %v1395 = vunpack.c.l.b16 %v1370
        %v1396 = vunpack.c.l.b16 %v1371
        %v1397 = vpack.c.b16 %v1386, %v1385
        %v1398 = vpack.c.b16 %v1388, %v1387
        %v1399 = vpack.c.b16 %v1390, %v1389
        %v1400 = vpack.c.b16 %v1392, %v1391
        %v1401 = vpack.c.b16 %v1394, %v1393
        %v1402 = vpack.c.b16 %v1396, %v1395
        %vm1409 = vcmask 785408
        %v1411 = vsel %vm1409, %v1359, 0
        %1413 = vmatprep.subr.bf16.mxu0 0
        %1414 = vmatpush1.bf16.msra.mxu0 %v1397
        %1415 = vmatprep.subr.bf16.mxu0 0
        %1416 = vmatpush1.bf16.msra.mxu0 %v1398
        %1417 = vmatprep.subr.bf16.mxu0 0
        %1418 = vmatpush1.bf16.msra.mxu0 %v1399
        %1419 = vmatprep.subr.bf16.mxu0 0
        %1420 = vmatpush1.bf16.msra.mxu0 %v1400
        %1421 = vmatprep.subr.bf16.mxu0 0
        %1422 = vmatpush1.bf16.msra.mxu0 %v1401
        %1423 = vmatprep.subr.bf16.mxu0 0
        %1424 = vmatpush1.bf16.msra.mxu0 %v1402
        %1425 = vmatprep.subr.bf16.mxu0 0
        %1426 = vmatpush1.bf16.msra.mxu0 0
        %1427 = vmatprep.subr.bf16.mxu0 0
        %1428 = vmatpush1.bf16.msra.mxu0 0
        %1429 = vmatprep.subr.bf16.mxu0 0
        %1430 = vmatpush1.bf16.msra.mxu0 0
        %1431 = vmatprep.subr.bf16.mxu0 0
        %1432 = vmatpush1.bf16.msra.mxu0 0
        %1433 = vmatprep.subr.bf16.mxu0 0
        %1434 = vmatpush1.bf16.msra.mxu0 0
        %1435 = vmatprep.subr.bf16.mxu0 0
        %1436 = vmatpush1.bf16.msra.mxu0 0
        %1437 = vmatprep.subr.bf16.mxu0 0
        %1438 = vmatpush1.bf16.msra.mxu0 0
        %1439 = vmatprep.subr.bf16.mxu0 0
        %1440 = vmatpush1.bf16.msra.mxu0 0
        %1441 = vmatprep.subr.bf16.mxu0 0
        %1442 = vmatpush1.bf16.msra.mxu0 0
        %1443 = vmatprep.subr.bf16.mxu0 0
        %1444 = vmatpush1.bf16.msra.mxu0 0
        %1445 = vmatprep.mubr.bf16.mxu0 0
        %1446 = vmatmul.mubr.bf16.gmra.mrb[0].mxu0 %v1411
        %v1447 = vpop.f32.mrb[0].mxu0
        %v1448 = vadd.f32 %v1372, %v1447
        %v1449 = vpop.f32.mrb[0].mxu0
        %v1450 = vpop.f32.mrb[0].mxu0
        %v1451 = vpop.f32.mrb[0].mxu0
        %1452 = vdwg.mxu0
        %v1453 = vlaneseq
        %v1454 = vshrl.u32 %v1453, 7
        %v1455 = vsub.s32 0, %v1454
        %v1456 = vrot.slane %v1448, %v1455
        %1457 = vst [vmem:[%s705] sm:$0xff] %v1456
        %s1458 = sand.u32 %s436, 1
        %s1459 = scalar_lea.sflag [#allocation4], %s1458
        %s1460 = sand.u32 %s436, 1
        %s1461 = smul.addr %s1460, 8
        %s1462 = scalar_lea.vmem [#allocation14], %s1461
        // Predicated region
        $region121: #{tpu_custom_call.1} parent=91 // pred_check
          %p1463 = pneg %p446
        $region122: #{tpu_custom_call.1} parent=91 // pred_check_branch
          %1465 = sbr.rel (%p1463) target = $region124
        $region123: #{tpu_custom_call.1} parent=91 // pred_region
          %s1467 = ssub.s32 128, 128
          %1468 = vsyncadd %s1459, %s1467
          %s1469 = smul.addr %s40, 128
          %s1470 = scalar_lea.hbm %s18, %s1469
          %s1472 = sshll.u32 %s1462, 4
          %s1473 = int_to_ptr.vmem [resolvable:$true] %s1472
          %1475 = dma.vmem_to_hbm [thread:$0]  %s1473, 128, %s1470, %s1459
        $region124: #{tpu_custom_call.1} parent=91 // pred_fallthru
          _
      $region92: #{tpu_custom_call.1} parent=5 // pred_fallthru
        _
      %p1476 = scmp.le.s32.totalorder 2, %s35
      // Predicated region
      $region125: #{tpu_custom_call.1} parent=5 // pred_check
        %p1477 = pneg %p1476
      $region126: #{tpu_custom_call.1} parent=5 // pred_check_branch
        %1479 = sbr.rel (%p1477) target = $region128
      $region127: #{tpu_custom_call.1} parent=5 // pred_region
        %s1480 = ssub.s32 %s35, 2
        // Predicated region
        $region129: #{tpu_custom_call.1} parent=127 // pred_check
          %p1481 = pneg %p452
        $region130: #{tpu_custom_call.1} parent=127 // pred_check_branch
          %1483 = sbr.rel (%p1481) target = $region132
        $region131: #{tpu_custom_call.1} parent=127 // pred_region
          %s1484 = sand.u32 %s437, 1
          %s1485 = scalar_lea.sflag [#allocation4], %s1484
          %s1486 = sand.u32 %s437, 1
          %s1487 = smul.addr %s1486, 8
          %s1488 = scalar_lea.vmem [#allocation14], %s1487
          %1489 = dma.done %s1485, 128
        $region132: #{tpu_custom_call.1} parent=127 // pred_fallthru
          _
      $region128: #{tpu_custom_call.1} parent=5 // pred_fallthru
        _
    $region6: #{tpu_custom_call.1} parent=1 // loop_footer
      %s39 = sadd.s32 1, %s35
    $region7: #{tpu_custom_call.1} parent=1 // loop_footer_branch
      %34 = sbr.rel target = $region3
    $region8: #{tpu_custom_call.1} parent=1 // loop_exit
      _
    %1490 = vsyncpa [#allocation3], 1
    %s1491 = scalar_lea.sflag [#allocation3], 1
    %1492 = vsyncpa %s1491, 1
    %1493 = vsyncpa [#allocation6], 1
    %s1494 = scalar_lea.sflag [#allocation6], 1
    %1495 = vsyncpa %s1494, 1
    %1496 = vsyncpa [#allocation9], 1
    %1497 = vsyncpa [#allocation12], 1
    %1498 = vsyncpa [#allocation4], 1
    %s1499 = scalar_lea.sflag [#allocation4], 1
    %1500 = vsyncpa %s1499, 1

</llo_original>
